<compile_context>
chip_gen: v5e
topology: v5e:2x2
jax: 0.10.0
libtpu: 0.0.40
codegen_flags: <defaults>
</compile_context>

<pallas_src>
from functools import partial

import jax
import jax.numpy as jnp
from jax.experimental import pallas as pl
from jax.experimental.pallas import tpu as pltpu


def _local_l1_kernel(x_ref, t_ref, o_ref, *, K, Wp, LX, C):
    """Per-grid-step kernel.

    x_ref: (NB, C, LX)  inputs, rows flattened with stride Wp (pad cols are 0)
    t_ref: (NB, C, LT)  zero-padded targets, rows flattened with stride Wp
    o_ref: (NB, 1, LX)  f32 per-pixel min over K*K shifts of sum_c|x-t| / C
    """
    # Hoisted casts: one f32 copy of each block, done once per grid step.
    x = x_ref[...].astype(jnp.float32)            # (NB, C, LX)
    t = t_ref[...].astype(jnp.float32)            # (NB, C, LT)

    best = None
    for dh in range(K):
        for dw in range(K):
            # The whole (dh, dw) shift is ONE static lane-offset slice of the
            # flattened padded target: element h*Wp + w of the slice equals
            # t_pad[h+dh, w+dw] for every kept column w < W.  Columns w >= W
            # never reach the result (dropped in the wrapper), so cross-row
            # bleed there is harmless.
            off = dh * Wp + dw
            ts = t[:, :, off:off + LX]                       # (NB, C, LX)
            d = jnp.sum(jnp.abs(x - ts), axis=1)             # (NB, LX) f32
            best = d if best is None else jnp.minimum(best, d)

    # 1/C hoisted out of the K*K loop.
    o_ref[:, 0, :] = best * (1.0 / C)


def _pick_batch_block(n, per_image_bytes):
    """Images per grid step: amortize the ~0.35us per-step overhead for tiny
    images while keeping >= 2 grid steps (v7x megacore) when n > 1."""
    budget = 1 << 20                       # ~1 MiB of f32 working set per step
    cap = max(1, budget // max(per_image_bytes, 1))
    if n > 1:
        cap = min(cap, max(1, n // 2))     # leave work for both TensorCores
    cap = min(cap, n)
    nb = 1
    for d in range(1, cap + 1):            # largest divisor of n not above cap
        if n % d == 0:
            nb = d
    return nb


def local_l1_loss(inputs, targets, kernel_size=7):
    """JAX/Pallas equivalent of LocalL1Loss.forward (NCHW inputs)."""
    assert inputs.shape == targets.shape, "input and target shapes do not match"
    # F.unfold(kernel_size=K, stride=1, padding=K//2) preserves HxW only for
    # odd K; even K would silently diverge from the PyTorch reference.
    assert kernel_size % 2 == 1, "kernel_size must be odd"
    N, C, H, W = inputs.shape
    K = kernel_size
    P = K // 2
    Hp, Wp = H + 2 * P, W + 2 * P
    LX = H * Wp            # flattened row-major length of x / output (stride Wp)
    LT = (Hp + 1) * Wp     # flattened padded target (+1 zero guard row so the
                           # largest shift's slice never runs off the end)

    # Lane-dense flattened operands in the native dtype (cast once in-kernel).
    # x rows are right-padded to the Wp stride so x and every shifted target
    # slice align element-for-element in the flattened layout; target padding
    # is the zero padding of F.unfold plus one guard row at the bottom.
    x_flat = jnp.pad(inputs, ((0, 0), (0, 0), (0, 0), (0, K - 1))).reshape(N, C, LX)
    t_flat = jnp.pad(targets, ((0, 0), (0, 0), (P, P + 1), (P, P))).reshape(N, C, LT)

    item = jnp.dtype(inputs.dtype).itemsize
    nb = _pick_batch_block(N, C * (LX + LT) * 4)
    steps = N // nb

    # VMEM budget: double-buffered native blocks + hoisted f32 copies of x/t +
    # a few (nb, C, LX) f32 shift-loop temporaries, capped by the physical
    # VMEM of this generation minus headroom (64 MiB/TC on v7x, 128 MiB on
    # v5e/v6e).
    x_blk = nb * C * LX * item
    t_blk = nb * C * LT * item
    o_blk = nb * LX * 4
    needed = (2 * (x_blk + t_blk + o_blk)        # pipeline double-buffers
              + 4 * nb * C * (LX + LT)           # hoisted f32 copies of x, t
              + 6 * 4 * nb * C * LX              # shift-loop temporaries
              + (2 << 20))                       # slack
    try:
        vmem_cap = int(pltpu.get_tpu_info().vmem_capacity_bytes)
    except Exception:
        vmem_cap = 64 << 20                      # v7x per-TC VMEM (safe floor)
    vmem_limit = int(min(max(needed, 16 << 20),
                         max(vmem_cap - (16 << 20), 32 << 20)))
    # TODO(synk): images whose whole-image blocks exceed this budget need an
    # H-tiled halo grid (overlapping target windows via manual DMA); not
    # required at these shapes.

    loss_flat = pl.pallas_call(
        partial(_local_l1_kernel, K=K, Wp=Wp, LX=LX, C=C),
        out_shape=jax.ShapeDtypeStruct((N, 1, LX), jnp.float32),
        grid_spec=pltpu.PrefetchScalarGridSpec(
            num_scalar_prefetch=0,
            grid=(steps,),
            in_specs=[
                pl.BlockSpec((nb, C, LX), lambda i: (i, 0, 0)),
                pl.BlockSpec((nb, C, LT), lambda i: (i, 0, 0)),
            ],
            out_specs=pl.BlockSpec((nb, 1, LX), lambda i: (i, 0, 0)),
        ),
        compiler_params=pltpu.CompilerParams(
            dimension_semantics=("parallel",),
            vmem_limit_bytes=vmem_limit,
        ),
    )(x_flat, t_flat)

    # Drop the right-pad columns (w >= W) and reduce to the scalar mean
    # (plain-JAX glue; off the critical path for this compute-bound kernel).
    loss_map = loss_flat.reshape(N, H, Wp)[:, :, :W]
    return jnp.mean(loss_map)


def _reference_local_l1_loss(inputs, targets, kernel_size=7):
    """Pure-JAX reference mirroring the PyTorch semantics (sanity check)."""
    N, C, H, W = inputs.shape
    K = kernel_size
    P = K // 2
    tp = jnp.pad(targets, ((0, 0), (0, 0), (P, P), (P, P)))
    dists = []
    for dh in range(K):
        for dw in range(K):
            shifted = tp[:, :, dh:dh + H, dw:dw + W]
            dists.append(jnp.mean(jnp.abs(inputs - shifted), axis=1))  # (N,H,W)
    dist = jnp.stack(dists, axis=1)          # (N, K*K, H, W)
    loss = jnp.min(dist, axis=1)             # (N, H, W)
    return jnp.mean(loss)


if __name__ == "__main__":
    key = jax.random.PRNGKey(0)
    k1, k2 = jax.random.split(key)
    # Small shapes consistent with the forward: N=2, C=4, H=W=16, K=7.
    x = jax.random.normal(k1, (2, 4, 16, 16), dtype=jnp.float32)
    y = jax.random.normal(k2, (2, 4, 16, 16), dtype=jnp.float32)

    loss = jax.block_until_ready(local_l1_loss(x, y, kernel_size=7))
    ref = jax.block_until_ready(_reference_local_l1_loss(x, y, kernel_size=7))
    assert jnp.allclose(loss, ref, atol=1e-5, rtol=1e-5), (loss, ref)

    print("KERNEL_OK")
</pallas_src>

<mosaic_0001>
module attributes {stable_mosaic.version = 11 : i64} {
  func.func @_local_l1_kernel(%arg0: i32, %arg1: memref<1x4x352xf32, #tpu.memory_space<vmem>>, %arg2: memref<1x4x506xf32, #tpu.memory_space<vmem>>, %arg3: memref<1x1x352xf32, #tpu.memory_space<vmem>>) attributes {dimension_semantics = [#tpu.dimension_semantics<parallel>], iteration_bounds = array<i64: 2>, scalar_prefetch = 0 : i64, scratch_operands = 0 : i64, tpu.core_type = #tpu.core_type<tc>, window_params = [{transform_indices = @transform_0, window_bounds = array<i64: 1, 4, 352>}, {transform_indices = @transform_1, window_bounds = array<i64: 1, 4, 506>}, {transform_indices = @transform_2, window_bounds = array<i64: 1, 1, 352>}]} {
    %c0 = arith.constant 0 : index
    %c0_0 = arith.constant 0 : index
    %c0_1 = arith.constant 0 : index
    %0 = vector.load %arg1[%c0, %c0_0, %c0_1] : memref<1x4x352xf32, #tpu.memory_space<vmem>>, vector<1x4x352xf32>
    %c0_2 = arith.constant 0 : index
    %c0_3 = arith.constant 0 : index
    %c0_4 = arith.constant 0 : index
    %1 = vector.load %arg2[%c0_2, %c0_3, %c0_4] : memref<1x4x506xf32, #tpu.memory_space<vmem>>, vector<1x4x506xf32>
    %2 = vector.extract_strided_slice %1 {offsets = [0, 0, 0], sizes = [1, 4, 352], strides = [1, 1, 1]} : vector<1x4x506xf32> to vector<1x4x352xf32>
    %3 = arith.subf %0, %2 : vector<1x4x352xf32>
    %4 = math.absf %3 : vector<1x4x352xf32>
    %cst = arith.constant dense<0.000000e+00> : vector<1x352xf32>
    %5 = vector.multi_reduction <add>, %4, %cst [1] : vector<1x4x352xf32> to vector<1x352xf32>
    %6 = vector.extract_strided_slice %1 {offsets = [0, 0, 1], sizes = [1, 4, 352], strides = [1, 1, 1]} : vector<1x4x506xf32> to vector<1x4x352xf32>
    %7 = arith.subf %0, %6 : vector<1x4x352xf32>
    %8 = math.absf %7 : vector<1x4x352xf32>
    %cst_5 = arith.constant dense<0.000000e+00> : vector<1x352xf32>
    %9 = vector.multi_reduction <add>, %8, %cst_5 [1] : vector<1x4x352xf32> to vector<1x352xf32>
    %10 = arith.minimumf %5, %9 : vector<1x352xf32>
    %11 = vector.extract_strided_slice %1 {offsets = [0, 0, 2], sizes = [1, 4, 352], strides = [1, 1, 1]} : vector<1x4x506xf32> to vector<1x4x352xf32>
    %12 = arith.subf %0, %11 : vector<1x4x352xf32>
    %13 = math.absf %12 : vector<1x4x352xf32>
    %cst_6 = arith.constant dense<0.000000e+00> : vector<1x352xf32>
    %14 = vector.multi_reduction <add>, %13, %cst_6 [1] : vector<1x4x352xf32> to vector<1x352xf32>
    %15 = arith.minimumf %10, %14 : vector<1x352xf32>
    %16 = vector.extract_strided_slice %1 {offsets = [0, 0, 3], sizes = [1, 4, 352], strides = [1, 1, 1]} : vector<1x4x506xf32> to vector<1x4x352xf32>
    %17 = arith.subf %0, %16 : vector<1x4x352xf32>
    %18 = math.absf %17 : vector<1x4x352xf32>
    %cst_7 = arith.constant dense<0.000000e+00> : vector<1x352xf32>
    %19 = vector.multi_reduction <add>, %18, %cst_7 [1] : vector<1x4x352xf32> to vector<1x352xf32>
    %20 = arith.minimumf %15, %19 : vector<1x352xf32>
    %21 = vector.extract_strided_slice %1 {offsets = [0, 0, 4], sizes = [1, 4, 352], strides = [1, 1, 1]} : vector<1x4x506xf32> to vector<1x4x352xf32>
    %22 = arith.subf %0, %21 : vector<1x4x352xf32>
    %23 = math.absf %22 : vector<1x4x352xf32>
    %cst_8 = arith.constant dense<0.000000e+00> : vector<1x352xf32>
    %24 = vector.multi_reduction <add>, %23, %cst_8 [1] : vector<1x4x352xf32> to vector<1x352xf32>
    %25 = arith.minimumf %20, %24 : vector<1x352xf32>
    %26 = vector.extract_strided_slice %1 {offsets = [0, 0, 5], sizes = [1, 4, 352], strides = [1, 1, 1]} : vector<1x4x506xf32> to vector<1x4x352xf32>
    %27 = arith.subf %0, %26 : vector<1x4x352xf32>
    %28 = math.absf %27 : vector<1x4x352xf32>
    %cst_9 = arith.constant dense<0.000000e+00> : vector<1x352xf32>
    %29 = vector.multi_reduction <add>, %28, %cst_9 [1] : vector<1x4x352xf32> to vector<1x352xf32>
    %30 = arith.minimumf %25, %29 : vector<1x352xf32>
    %31 = vector.extract_strided_slice %1 {offsets = [0, 0, 6], sizes = [1, 4, 352], strides = [1, 1, 1]} : vector<1x4x506xf32> to vector<1x4x352xf32>
    %32 = arith.subf %0, %31 : vector<1x4x352xf32>
    %33 = math.absf %32 : vector<1x4x352xf32>
    %cst_10 = arith.constant dense<0.000000e+00> : vector<1x352xf32>
    %34 = vector.multi_reduction <add>, %33, %cst_10 [1] : vector<1x4x352xf32> to vector<1x352xf32>
    %35 = arith.minimumf %30, %34 : vector<1x352xf32>
    %36 = vector.extract_strided_slice %1 {offsets = [0, 0, 22], sizes = [1, 4, 352], strides = [1, 1, 1]} : vector<1x4x506xf32> to vector<1x4x352xf32>
    %37 = arith.subf %0, %36 : vector<1x4x352xf32>
    %38 = math.absf %37 : vector<1x4x352xf32>
    %cst_11 = arith.constant dense<0.000000e+00> : vector<1x352xf32>
    %39 = vector.multi_reduction <add>, %38, %cst_11 [1] : vector<1x4x352xf32> to vector<1x352xf32>
    %40 = arith.minimumf %35, %39 : vector<1x352xf32>
    %41 = vector.extract_strided_slice %1 {offsets = [0, 0, 23], sizes = [1, 4, 352], strides = [1, 1, 1]} : vector<1x4x506xf32> to vector<1x4x352xf32>
    %42 = arith.subf %0, %41 : vector<1x4x352xf32>
    %43 = math.absf %42 : vector<1x4x352xf32>
    %cst_12 = arith.constant dense<0.000000e+00> : vector<1x352xf32>
    %44 = vector.multi_reduction <add>, %43, %cst_12 [1] : vector<1x4x352xf32> to vector<1x352xf32>
    %45 = arith.minimumf %40, %44 : vector<1x352xf32>
    %46 = vector.extract_strided_slice %1 {offsets = [0, 0, 24], sizes = [1, 4, 352], strides = [1, 1, 1]} : vector<1x4x506xf32> to vector<1x4x352xf32>
    %47 = arith.subf %0, %46 : vector<1x4x352xf32>
    %48 = math.absf %47 : vector<1x4x352xf32>
    %cst_13 = arith.constant dense<0.000000e+00> : vector<1x352xf32>
    %49 = vector.multi_reduction <add>, %48, %cst_13 [1] : vector<1x4x352xf32> to vector<1x352xf32>
    %50 = arith.minimumf %45, %49 : vector<1x352xf32>
    %51 = vector.extract_strided_slice %1 {offsets = [0, 0, 25], sizes = [1, 4, 352], strides = [1, 1, 1]} : vector<1x4x506xf32> to vector<1x4x352xf32>
    %52 = arith.subf %0, %51 : vector<1x4x352xf32>
    %53 = math.absf %52 : vector<1x4x352xf32>
    %cst_14 = arith.constant dense<0.000000e+00> : vector<1x352xf32>
    %54 = vector.multi_reduction <add>, %53, %cst_14 [1] : vector<1x4x352xf32> to vector<1x352xf32>
    %55 = arith.minimumf %50, %54 : vector<1x352xf32>
    %56 = vector.extract_strided_slice %1 {offsets = [0, 0, 26], sizes = [1, 4, 352], strides = [1, 1, 1]} : vector<1x4x506xf32> to vector<1x4x352xf32>
    %57 = arith.subf %0, %56 : vector<1x4x352xf32>
    %58 = math.absf %57 : vector<1x4x352xf32>
    %cst_15 = arith.constant dense<0.000000e+00> : vector<1x352xf32>
    %59 = vector.multi_reduction <add>, %58, %cst_15 [1] : vector<1x4x352xf32> to vector<1x352xf32>
    %60 = arith.minimumf %55, %59 : vector<1x352xf32>
    %61 = vector.extract_strided_slice %1 {offsets = [0, 0, 27], sizes = [1, 4, 352], strides = [1, 1, 1]} : vector<1x4x506xf32> to vector<1x4x352xf32>
    %62 = arith.subf %0, %61 : vector<1x4x352xf32>
    %63 = math.absf %62 : vector<1x4x352xf32>
    %cst_16 = arith.constant dense<0.000000e+00> : vector<1x352xf32>
    %64 = vector.multi_reduction <add>, %63, %cst_16 [1] : vector<1x4x352xf32> to vector<1x352xf32>
    %65 = arith.minimumf %60, %64 : vector<1x352xf32>
    %66 = vector.extract_strided_slice %1 {offsets = [0, 0, 28], sizes = [1, 4, 352], strides = [1, 1, 1]} : vector<1x4x506xf32> to vector<1x4x352xf32>
    %67 = arith.subf %0, %66 : vector<1x4x352xf32>
    %68 = math.absf %67 : vector<1x4x352xf32>
    %cst_17 = arith.constant dense<0.000000e+00> : vector<1x352xf32>
    %69 = vector.multi_reduction <add>, %68, %cst_17 [1] : vector<1x4x352xf32> to vector<1x352xf32>
    %70 = arith.minimumf %65, %69 : vector<1x352xf32>
    %71 = vector.extract_strided_slice %1 {offsets = [0, 0, 44], sizes = [1, 4, 352], strides = [1, 1, 1]} : vector<1x4x506xf32> to vector<1x4x352xf32>
    %72 = arith.subf %0, %71 : vector<1x4x352xf32>
    %73 = math.absf %72 : vector<1x4x352xf32>
    %cst_18 = arith.constant dense<0.000000e+00> : vector<1x352xf32>
    %74 = vector.multi_reduction <add>, %73, %cst_18 [1] : vector<1x4x352xf32> to vector<1x352xf32>
    %75 = arith.minimumf %70, %74 : vector<1x352xf32>
    %76 = vector.extract_strided_slice %1 {offsets = [0, 0, 45], sizes = [1, 4, 352], strides = [1, 1, 1]} : vector<1x4x506xf32> to vector<1x4x352xf32>
    %77 = arith.subf %0, %76 : vector<1x4x352xf32>
    %78 = math.absf %77 : vector<1x4x352xf32>
    %cst_19 = arith.constant dense<0.000000e+00> : vector<1x352xf32>
    %79 = vector.multi_reduction <add>, %78, %cst_19 [1] : vector<1x4x352xf32> to vector<1x352xf32>
    %80 = arith.minimumf %75, %79 : vector<1x352xf32>
    %81 = vector.extract_strided_slice %1 {offsets = [0, 0, 46], sizes = [1, 4, 352], strides = [1, 1, 1]} : vector<1x4x506xf32> to vector<1x4x352xf32>
    %82 = arith.subf %0, %81 : vector<1x4x352xf32>
    %83 = math.absf %82 : vector<1x4x352xf32>
    %cst_20 = arith.constant dense<0.000000e+00> : vector<1x352xf32>
    %84 = vector.multi_reduction <add>, %83, %cst_20 [1] : vector<1x4x352xf32> to vector<1x352xf32>
    %85 = arith.minimumf %80, %84 : vector<1x352xf32>
    %86 = vector.extract_strided_slice %1 {offsets = [0, 0, 47], sizes = [1, 4, 352], strides = [1, 1, 1]} : vector<1x4x506xf32> to vector<1x4x352xf32>
    %87 = arith.subf %0, %86 : vector<1x4x352xf32>
    %88 = math.absf %87 : vector<1x4x352xf32>
    %cst_21 = arith.constant dense<0.000000e+00> : vector<1x352xf32>
    %89 = vector.multi_reduction <add>, %88, %cst_21 [1] : vector<1x4x352xf32> to vector<1x352xf32>
    %90 = arith.minimumf %85, %89 : vector<1x352xf32>
    %91 = vector.extract_strided_slice %1 {offsets = [0, 0, 48], sizes = [1, 4, 352], strides = [1, 1, 1]} : vector<1x4x506xf32> to vector<1x4x352xf32>
    %92 = arith.subf %0, %91 : vector<1x4x352xf32>
    %93 = math.absf %92 : vector<1x4x352xf32>
    %cst_22 = arith.constant dense<0.000000e+00> : vector<1x352xf32>
    %94 = vector.multi_reduction <add>, %93, %cst_22 [1] : vector<1x4x352xf32> to vector<1x352xf32>
    %95 = arith.minimumf %90, %94 : vector<1x352xf32>
    %96 = vector.extract_strided_slice %1 {offsets = [0, 0, 49], sizes = [1, 4, 352], strides = [1, 1, 1]} : vector<1x4x506xf32> to vector<1x4x352xf32>
    %97 = arith.subf %0, %96 : vector<1x4x352xf32>
    %98 = math.absf %97 : vector<1x4x352xf32>
    %cst_23 = arith.constant dense<0.000000e+00> : vector<1x352xf32>
    %99 = vector.multi_reduction <add>, %98, %cst_23 [1] : vector<1x4x352xf32> to vector<1x352xf32>
    %100 = arith.minimumf %95, %99 : vector<1x352xf32>
    %101 = vector.extract_strided_slice %1 {offsets = [0, 0, 50], sizes = [1, 4, 352], strides = [1, 1, 1]} : vector<1x4x506xf32> to vector<1x4x352xf32>
    %102 = arith.subf %0, %101 : vector<1x4x352xf32>
    %103 = math.absf %102 : vector<1x4x352xf32>
    %cst_24 = arith.constant dense<0.000000e+00> : vector<1x352xf32>
    %104 = vector.multi_reduction <add>, %103, %cst_24 [1] : vector<1x4x352xf32> to vector<1x352xf32>
    %105 = arith.minimumf %100, %104 : vector<1x352xf32>
    %106 = vector.extract_strided_slice %1 {offsets = [0, 0, 66], sizes = [1, 4, 352], strides = [1, 1, 1]} : vector<1x4x506xf32> to vector<1x4x352xf32>
    %107 = arith.subf %0, %106 : vector<1x4x352xf32>
    %108 = math.absf %107 : vector<1x4x352xf32>
    %cst_25 = arith.constant dense<0.000000e+00> : vector<1x352xf32>
    %109 = vector.multi_reduction <add>, %108, %cst_25 [1] : vector<1x4x352xf32> to vector<1x352xf32>
    %110 = arith.minimumf %105, %109 : vector<1x352xf32>
    %111 = vector.extract_strided_slice %1 {offsets = [0, 0, 67], sizes = [1, 4, 352], strides = [1, 1, 1]} : vector<1x4x506xf32> to vector<1x4x352xf32>
    %112 = arith.subf %0, %111 : vector<1x4x352xf32>
    %113 = math.absf %112 : vector<1x4x352xf32>
    %cst_26 = arith.constant dense<0.000000e+00> : vector<1x352xf32>
    %114 = vector.multi_reduction <add>, %113, %cst_26 [1] : vector<1x4x352xf32> to vector<1x352xf32>
    %115 = arith.minimumf %110, %114 : vector<1x352xf32>
    %116 = vector.extract_strided_slice %1 {offsets = [0, 0, 68], sizes = [1, 4, 352], strides = [1, 1, 1]} : vector<1x4x506xf32> to vector<1x4x352xf32>
    %117 = arith.subf %0, %116 : vector<1x4x352xf32>
    %118 = math.absf %117 : vector<1x4x352xf32>
    %cst_27 = arith.constant dense<0.000000e+00> : vector<1x352xf32>
    %119 = vector.multi_reduction <add>, %118, %cst_27 [1] : vector<1x4x352xf32> to vector<1x352xf32>
    %120 = arith.minimumf %115, %119 : vector<1x352xf32>
    %121 = vector.extract_strided_slice %1 {offsets = [0, 0, 69], sizes = [1, 4, 352], strides = [1, 1, 1]} : vector<1x4x506xf32> to vector<1x4x352xf32>
    %122 = arith.subf %0, %121 : vector<1x4x352xf32>
    %123 = math.absf %122 : vector<1x4x352xf32>
    %cst_28 = arith.constant dense<0.000000e+00> : vector<1x352xf32>
    %124 = vector.multi_reduction <add>, %123, %cst_28 [1] : vector<1x4x352xf32> to vector<1x352xf32>
    %125 = arith.minimumf %120, %124 : vector<1x352xf32>
    %126 = vector.extract_strided_slice %1 {offsets = [0, 0, 70], sizes = [1, 4, 352], strides = [1, 1, 1]} : vector<1x4x506xf32> to vector<1x4x352xf32>
    %127 = arith.subf %0, %126 : vector<1x4x352xf32>
    %128 = math.absf %127 : vector<1x4x352xf32>
    %cst_29 = arith.constant dense<0.000000e+00> : vector<1x352xf32>
    %129 = vector.multi_reduction <add>, %128, %cst_29 [1] : vector<1x4x352xf32> to vector<1x352xf32>
    %130 = arith.minimumf %125, %129 : vector<1x352xf32>
    %131 = vector.extract_strided_slice %1 {offsets = [0, 0, 71], sizes = [1, 4, 352], strides = [1, 1, 1]} : vector<1x4x506xf32> to vector<1x4x352xf32>
    %132 = arith.subf %0, %131 : vector<1x4x352xf32>
    %133 = math.absf %132 : vector<1x4x352xf32>
    %cst_30 = arith.constant dense<0.000000e+00> : vector<1x352xf32>
    %134 = vector.multi_reduction <add>, %133, %cst_30 [1] : vector<1x4x352xf32> to vector<1x352xf32>
    %135 = arith.minimumf %130, %134 : vector<1x352xf32>
    %136 = vector.extract_strided_slice %1 {offsets = [0, 0, 72], sizes = [1, 4, 352], strides = [1, 1, 1]} : vector<1x4x506xf32> to vector<1x4x352xf32>
    %137 = arith.subf %0, %136 : vector<1x4x352xf32>
    %138 = math.absf %137 : vector<1x4x352xf32>
    %cst_31 = arith.constant dense<0.000000e+00> : vector<1x352xf32>
    %139 = vector.multi_reduction <add>, %138, %cst_31 [1] : vector<1x4x352xf32> to vector<1x352xf32>
    %140 = arith.minimumf %135, %139 : vector<1x352xf32>
    %141 = vector.extract_strided_slice %1 {offsets = [0, 0, 88], sizes = [1, 4, 352], strides = [1, 1, 1]} : vector<1x4x506xf32> to vector<1x4x352xf32>
    %142 = arith.subf %0, %141 : vector<1x4x352xf32>
    %143 = math.absf %142 : vector<1x4x352xf32>
    %cst_32 = arith.constant dense<0.000000e+00> : vector<1x352xf32>
    %144 = vector.multi_reduction <add>, %143, %cst_32 [1] : vector<1x4x352xf32> to vector<1x352xf32>
    %145 = arith.minimumf %140, %144 : vector<1x352xf32>
    %146 = vector.extract_strided_slice %1 {offsets = [0, 0, 89], sizes = [1, 4, 352], strides = [1, 1, 1]} : vector<1x4x506xf32> to vector<1x4x352xf32>
    %147 = arith.subf %0, %146 : vector<1x4x352xf32>
    %148 = math.absf %147 : vector<1x4x352xf32>
    %cst_33 = arith.constant dense<0.000000e+00> : vector<1x352xf32>
    %149 = vector.multi_reduction <add>, %148, %cst_33 [1] : vector<1x4x352xf32> to vector<1x352xf32>
    %150 = arith.minimumf %145, %149 : vector<1x352xf32>
    %151 = vector.extract_strided_slice %1 {offsets = [0, 0, 90], sizes = [1, 4, 352], strides = [1, 1, 1]} : vector<1x4x506xf32> to vector<1x4x352xf32>
    %152 = arith.subf %0, %151 : vector<1x4x352xf32>
    %153 = math.absf %152 : vector<1x4x352xf32>
    %cst_34 = arith.constant dense<0.000000e+00> : vector<1x352xf32>
    %154 = vector.multi_reduction <add>, %153, %cst_34 [1] : vector<1x4x352xf32> to vector<1x352xf32>
    %155 = arith.minimumf %150, %154 : vector<1x352xf32>
    %156 = vector.extract_strided_slice %1 {offsets = [0, 0, 91], sizes = [1, 4, 352], strides = [1, 1, 1]} : vector<1x4x506xf32> to vector<1x4x352xf32>
    %157 = arith.subf %0, %156 : vector<1x4x352xf32>
    %158 = math.absf %157 : vector<1x4x352xf32>
    %cst_35 = arith.constant dense<0.000000e+00> : vector<1x352xf32>
    %159 = vector.multi_reduction <add>, %158, %cst_35 [1] : vector<1x4x352xf32> to vector<1x352xf32>
    %160 = arith.minimumf %155, %159 : vector<1x352xf32>
    %161 = vector.extract_strided_slice %1 {offsets = [0, 0, 92], sizes = [1, 4, 352], strides = [1, 1, 1]} : vector<1x4x506xf32> to vector<1x4x352xf32>
    %162 = arith.subf %0, %161 : vector<1x4x352xf32>
    %163 = math.absf %162 : vector<1x4x352xf32>
    %cst_36 = arith.constant dense<0.000000e+00> : vector<1x352xf32>
    %164 = vector.multi_reduction <add>, %163, %cst_36 [1] : vector<1x4x352xf32> to vector<1x352xf32>
    %165 = arith.minimumf %160, %164 : vector<1x352xf32>
    %166 = vector.extract_strided_slice %1 {offsets = [0, 0, 93], sizes = [1, 4, 352], strides = [1, 1, 1]} : vector<1x4x506xf32> to vector<1x4x352xf32>
    %167 = arith.subf %0, %166 : vector<1x4x352xf32>
    %168 = math.absf %167 : vector<1x4x352xf32>
    %cst_37 = arith.constant dense<0.000000e+00> : vector<1x352xf32>
    %169 = vector.multi_reduction <add>, %168, %cst_37 [1] : vector<1x4x352xf32> to vector<1x352xf32>
    %170 = arith.minimumf %165, %169 : vector<1x352xf32>
    %171 = vector.extract_strided_slice %1 {offsets = [0, 0, 94], sizes = [1, 4, 352], strides = [1, 1, 1]} : vector<1x4x506xf32> to vector<1x4x352xf32>
    %172 = arith.subf %0, %171 : vector<1x4x352xf32>
    %173 = math.absf %172 : vector<1x4x352xf32>
    %cst_38 = arith.constant dense<0.000000e+00> : vector<1x352xf32>
    %174 = vector.multi_reduction <add>, %173, %cst_38 [1] : vector<1x4x352xf32> to vector<1x352xf32>
    %175 = arith.minimumf %170, %174 : vector<1x352xf32>
    %176 = vector.extract_strided_slice %1 {offsets = [0, 0, 110], sizes = [1, 4, 352], strides = [1, 1, 1]} : vector<1x4x506xf32> to vector<1x4x352xf32>
    %177 = arith.subf %0, %176 : vector<1x4x352xf32>
    %178 = math.absf %177 : vector<1x4x352xf32>
    %cst_39 = arith.constant dense<0.000000e+00> : vector<1x352xf32>
    %179 = vector.multi_reduction <add>, %178, %cst_39 [1] : vector<1x4x352xf32> to vector<1x352xf32>
    %180 = arith.minimumf %175, %179 : vector<1x352xf32>
    %181 = vector.extract_strided_slice %1 {offsets = [0, 0, 111], sizes = [1, 4, 352], strides = [1, 1, 1]} : vector<1x4x506xf32> to vector<1x4x352xf32>
    %182 = arith.subf %0, %181 : vector<1x4x352xf32>
    %183 = math.absf %182 : vector<1x4x352xf32>
    %cst_40 = arith.constant dense<0.000000e+00> : vector<1x352xf32>
    %184 = vector.multi_reduction <add>, %183, %cst_40 [1] : vector<1x4x352xf32> to vector<1x352xf32>
    %185 = arith.minimumf %180, %184 : vector<1x352xf32>
    %186 = vector.extract_strided_slice %1 {offsets = [0, 0, 112], sizes = [1, 4, 352], strides = [1, 1, 1]} : vector<1x4x506xf32> to vector<1x4x352xf32>
    %187 = arith.subf %0, %186 : vector<1x4x352xf32>
    %188 = math.absf %187 : vector<1x4x352xf32>
    %cst_41 = arith.constant dense<0.000000e+00> : vector<1x352xf32>
    %189 = vector.multi_reduction <add>, %188, %cst_41 [1] : vector<1x4x352xf32> to vector<1x352xf32>
    %190 = arith.minimumf %185, %189 : vector<1x352xf32>
    %191 = vector.extract_strided_slice %1 {offsets = [0, 0, 113], sizes = [1, 4, 352], strides = [1, 1, 1]} : vector<1x4x506xf32> to vector<1x4x352xf32>
    %192 = arith.subf %0, %191 : vector<1x4x352xf32>
    %193 = math.absf %192 : vector<1x4x352xf32>
    %cst_42 = arith.constant dense<0.000000e+00> : vector<1x352xf32>
    %194 = vector.multi_reduction <add>, %193, %cst_42 [1] : vector<1x4x352xf32> to vector<1x352xf32>
    %195 = arith.minimumf %190, %194 : vector<1x352xf32>
    %196 = vector.extract_strided_slice %1 {offsets = [0, 0, 114], sizes = [1, 4, 352], strides = [1, 1, 1]} : vector<1x4x506xf32> to vector<1x4x352xf32>
    %197 = arith.subf %0, %196 : vector<1x4x352xf32>
    %198 = math.absf %197 : vector<1x4x352xf32>
    %cst_43 = arith.constant dense<0.000000e+00> : vector<1x352xf32>
    %199 = vector.multi_reduction <add>, %198, %cst_43 [1] : vector<1x4x352xf32> to vector<1x352xf32>
    %200 = arith.minimumf %195, %199 : vector<1x352xf32>
    %201 = vector.extract_strided_slice %1 {offsets = [0, 0, 115], sizes = [1, 4, 352], strides = [1, 1, 1]} : vector<1x4x506xf32> to vector<1x4x352xf32>
    %202 = arith.subf %0, %201 : vector<1x4x352xf32>
    %203 = math.absf %202 : vector<1x4x352xf32>
    %cst_44 = arith.constant dense<0.000000e+00> : vector<1x352xf32>
    %204 = vector.multi_reduction <add>, %203, %cst_44 [1] : vector<1x4x352xf32> to vector<1x352xf32>
    %205 = arith.minimumf %200, %204 : vector<1x352xf32>
    %206 = vector.extract_strided_slice %1 {offsets = [0, 0, 116], sizes = [1, 4, 352], strides = [1, 1, 1]} : vector<1x4x506xf32> to vector<1x4x352xf32>
    %207 = arith.subf %0, %206 : vector<1x4x352xf32>
    %208 = math.absf %207 : vector<1x4x352xf32>
    %cst_45 = arith.constant dense<0.000000e+00> : vector<1x352xf32>
    %209 = vector.multi_reduction <add>, %208, %cst_45 [1] : vector<1x4x352xf32> to vector<1x352xf32>
    %210 = arith.minimumf %205, %209 : vector<1x352xf32>
    %211 = vector.extract_strided_slice %1 {offsets = [0, 0, 132], sizes = [1, 4, 352], strides = [1, 1, 1]} : vector<1x4x506xf32> to vector<1x4x352xf32>
    %212 = arith.subf %0, %211 : vector<1x4x352xf32>
    %213 = math.absf %212 : vector<1x4x352xf32>
    %cst_46 = arith.constant dense<0.000000e+00> : vector<1x352xf32>
    %214 = vector.multi_reduction <add>, %213, %cst_46 [1] : vector<1x4x352xf32> to vector<1x352xf32>
    %215 = arith.minimumf %210, %214 : vector<1x352xf32>
    %216 = vector.extract_strided_slice %1 {offsets = [0, 0, 133], sizes = [1, 4, 352], strides = [1, 1, 1]} : vector<1x4x506xf32> to vector<1x4x352xf32>
    %217 = arith.subf %0, %216 : vector<1x4x352xf32>
    %218 = math.absf %217 : vector<1x4x352xf32>
    %cst_47 = arith.constant dense<0.000000e+00> : vector<1x352xf32>
    %219 = vector.multi_reduction <add>, %218, %cst_47 [1] : vector<1x4x352xf32> to vector<1x352xf32>
    %220 = arith.minimumf %215, %219 : vector<1x352xf32>
    %221 = vector.extract_strided_slice %1 {offsets = [0, 0, 134], sizes = [1, 4, 352], strides = [1, 1, 1]} : vector<1x4x506xf32> to vector<1x4x352xf32>
    %222 = arith.subf %0, %221 : vector<1x4x352xf32>
    %223 = math.absf %222 : vector<1x4x352xf32>
    %cst_48 = arith.constant dense<0.000000e+00> : vector<1x352xf32>
    %224 = vector.multi_reduction <add>, %223, %cst_48 [1] : vector<1x4x352xf32> to vector<1x352xf32>
    %225 = arith.minimumf %220, %224 : vector<1x352xf32>
    %226 = vector.extract_strided_slice %1 {offsets = [0, 0, 135], sizes = [1, 4, 352], strides = [1, 1, 1]} : vector<1x4x506xf32> to vector<1x4x352xf32>
    %227 = arith.subf %0, %226 : vector<1x4x352xf32>
    %228 = math.absf %227 : vector<1x4x352xf32>
    %cst_49 = arith.constant dense<0.000000e+00> : vector<1x352xf32>
    %229 = vector.multi_reduction <add>, %228, %cst_49 [1] : vector<1x4x352xf32> to vector<1x352xf32>
    %230 = arith.minimumf %225, %229 : vector<1x352xf32>
    %231 = vector.extract_strided_slice %1 {offsets = [0, 0, 136], sizes = [1, 4, 352], strides = [1, 1, 1]} : vector<1x4x506xf32> to vector<1x4x352xf32>
    %232 = arith.subf %0, %231 : vector<1x4x352xf32>
    %233 = math.absf %232 : vector<1x4x352xf32>
    %cst_50 = arith.constant dense<0.000000e+00> : vector<1x352xf32>
    %234 = vector.multi_reduction <add>, %233, %cst_50 [1] : vector<1x4x352xf32> to vector<1x352xf32>
    %235 = arith.minimumf %230, %234 : vector<1x352xf32>
    %236 = vector.extract_strided_slice %1 {offsets = [0, 0, 137], sizes = [1, 4, 352], strides = [1, 1, 1]} : vector<1x4x506xf32> to vector<1x4x352xf32>
    %237 = arith.subf %0, %236 : vector<1x4x352xf32>
    %238 = math.absf %237 : vector<1x4x352xf32>
    %cst_51 = arith.constant dense<0.000000e+00> : vector<1x352xf32>
    %239 = vector.multi_reduction <add>, %238, %cst_51 [1] : vector<1x4x352xf32> to vector<1x352xf32>
    %240 = arith.minimumf %235, %239 : vector<1x352xf32>
    %241 = vector.extract_strided_slice %1 {offsets = [0, 0, 138], sizes = [1, 4, 352], strides = [1, 1, 1]} : vector<1x4x506xf32> to vector<1x4x352xf32>
    %242 = arith.subf %0, %241 : vector<1x4x352xf32>
    %243 = math.absf %242 : vector<1x4x352xf32>
    %cst_52 = arith.constant dense<0.000000e+00> : vector<1x352xf32>
    %244 = vector.multi_reduction <add>, %243, %cst_52 [1] : vector<1x4x352xf32> to vector<1x352xf32>
    %245 = arith.minimumf %240, %244 : vector<1x352xf32>
    %cst_53 = arith.constant 2.500000e-01 : f32
    %246 = vector.broadcast %cst_53 : f32 to vector<1x352xf32>
    %247 = arith.mulf %245, %246 : vector<1x352xf32>
    %c0_54 = arith.constant 0 : index
    %c0_55 = arith.constant 0 : index
    %c0_56 = arith.constant 0 : index
    %248 = vector.load %arg3[%c0_54, %c0_55, %c0_56] : memref<1x1x352xf32, #tpu.memory_space<vmem>>, vector<1x1x352xf32>
    %249 = vector.shape_cast %248 : vector<1x1x352xf32> to vector<1x352xf32>
    %250 = vector.shape_cast %247 : vector<1x352xf32> to vector<1x1x352xf32>
    tpu.vector_store %arg3[%c0_54, %c0_55, %c0_56], %250 {strides = array<i32>} : memref<1x1x352xf32, #tpu.memory_space<vmem>>, vector<1x1x352xf32>,
    return
  }
  func.func @transform_0(%arg0: i32) -> (i32, i32, i32) {
    %c0_i32 = arith.constant 0 : i32
    %c0_i32_0 = arith.constant 0 : i32
    %c0_i32_1 = arith.constant 0 : i32
    return %arg0, %c0_i32, %c0_i32_0 : i32, i32, i32
  }
  func.func @transform_1(%arg0: i32) -> (i32, i32, i32) {
    %c0_i32 = arith.constant 0 : i32
    %c0_i32_0 = arith.constant 0 : i32
    %c0_i32_1 = arith.constant 0 : i32
    return %arg0, %c0_i32, %c0_i32_0 : i32, i32, i32
  }
  func.func @transform_2(%arg0: i32) -> (i32, i32, i32) {
    %c0_i32 = arith.constant 0 : i32
    %c0_i32_0 = arith.constant 0 : i32
    %c0_i32_1 = arith.constant 0 : i32
    return %arg0, %c0_i32, %c0_i32_0 : i32, i32, i32
  }
}

</mosaic_0001>

<llo_original>
// kernel: tpu_custom_call.1
$region0: #{tpu_custom_call.1}
  #allocation0 [shape = 'u32[]', space=smem, size = 0x4, offset = 0x4, fixed_abs, tag = 'smem constant byte address 0x4 - core index']
  #allocation1 [shape = 'u32[72,128]{1,0:T(1,128)}', space=vmem, size = 0x9000, scoped, tag = 'internal scratch']
  %s0 = inlined_call_operand.hbm [shape: f32[2,4,352], index: 0, kind: input, shape index: {}]
  %s1 = inlined_call_operand.hbm [shape: f32[2,4,506], index: 1, kind: input, shape index: {}]
  %s2 = inlined_call_operand.hbm [shape: f32[2,1,352], index: 2, kind: output, shape index: {}]
  %s3 = sld [smem:[#allocation0]]
  $region49: #{tpu_custom_call.1} parent=0
    _
  %s5 = ssub.s32 1, %s3
  %s6 = scalar_select 0, %s5, %s3
  $region1: #{tpu_custom_call.1} parent=0
    #allocation2 [shape = 'u8[12288]{0}', space=vmem, size = 0x3000, scoped, tag = 'input window, operand 0']
    #allocation3 [shape = 's32[2]{0}', space=sflag, size = 0x8, scoped, tag = 'scoped memory for tpu_custom_call.1']
    #allocation4 [shape = 's32[2]{0}', space=sflag, size = 0x8, scoped, tag = 'scoped memory for tpu_custom_call.1']
    #allocation5 [shape = 'u8[16384]{0}', space=vmem, size = 0x4000, scoped, tag = 'input window, operand 1']
    #allocation6 [shape = 's32[2]{0}', space=sflag, size = 0x8, scoped, tag = 'scoped memory for tpu_custom_call.1']
    #allocation7 [shape = 'u8[3072]{0}', space=vmem, size = 0xc00, scoped, tag = 'output window, operand 0']
    %7 = vsyncpa [#allocation3], 0
    %s8 = scalar_lea.sflag [#allocation3], 1
    %9 = vsyncpa %s8, 0
    %10 = vsyncpa [#allocation6], 0
    %s11 = scalar_lea.sflag [#allocation6], 1
    %12 = vsyncpa %s11, 0
    %13 = vsyncpa [#allocation4], 0
    %s14 = scalar_lea.sflag [#allocation4], 1
    %15 = vsyncpa %s14, 0
    loop: start=0, step=1, limit=4
    $region2: #{tpu_custom_call.1} parent=1 // loop_pre_header
      _
    $region3: #{tpu_custom_call.1} parent=1 // loop_header
      %s17 = sphi 0, %s21
      %p18 = scmp.ge.s32.totalorder %s17, 4
      %s27 = sphi 0, %s29
      %s30 = sphi 0, %s27
      %s31 = sphi 0, %s30
      %s47 = sphi 0, %s31
      %s53 = sphi 0, %s55
      %s56 = sphi 0, %s53
      %s57 = sphi 0, %s56
      %s73 = sphi 0, %s57
      %s79 = sphi 0, %s81
      %s82 = sphi 0, %s79
      %s83 = sphi 0, %s82
      %s99 = sphi 0, %s83
    $region4: #{tpu_custom_call.1} parent=1 // loop_header_branch
      %20 = sbr.rel (%p18) target = $region8
    $region5: #{tpu_custom_call.1} parent=1 // loop_body
      %s22 = ssub.s32 %s17, 1
      %s23 = ssub.s32 %s17, 2
      %s24 = sadd.s32 %s17, 1
      %s25 = ssub.s32 %s17, %s24
      %p26 = scmp.eq.s32.totalorder %s25, 0
      %s28 = sadd.s32 %s27, 1
      %s29 = scalar_select %p26, %s27, %s28
      %p32 = pneg %p26
      %p33 = scmp.eq.s32.totalorder %s17, 1
      %p34 = por %p32, %p33
      %p35 = scmp.ne.s32.totalorder %s27, %s30
      %p36 = scmp.eq.s32.totalorder %s17, 0
      %p37 = por %p35, %p36
      %p38 = scmp.ne.s32.totalorder %s27, %s30
      %p39 = scmp.eq.s32.totalorder %s22, 1
      %p40 = por %p38, %p39
      %p41 = scmp.ne.s32.totalorder %s30, %s31
      %p42 = scmp.eq.s32.totalorder %s22, 0
      %p43 = por %p41, %p42
      %p44 = scmp.ne.s32.totalorder %s30, %s31
      %p45 = scmp.eq.s32.totalorder %s23, 1
      %p46 = por %p44, %p45
      %p48 = scmp.ne.s32.totalorder %s31, %s47
      %p49 = scmp.eq.s32.totalorder %s23, 0
      %p50 = por %p48, %p49
      %s51 = ssub.s32 %s17, %s24
      %p52 = scmp.eq.s32.totalorder %s51, 0
      %s54 = sadd.s32 %s53, 1
      %s55 = scalar_select %p52, %s53, %s54
      %p58 = pneg %p52
      %p59 = scmp.eq.s32.totalorder %s17, 1
      %p60 = por %p58, %p59
      %p61 = scmp.ne.s32.totalorder %s53, %s56
      %p62 = scmp.eq.s32.totalorder %s17, 0
      %p63 = por %p61, %p62
      %p64 = scmp.ne.s32.totalorder %s53, %s56
      %p65 = scmp.eq.s32.totalorder %s22, 1
      %p66 = por %p64, %p65
      %p67 = scmp.ne.s32.totalorder %s56, %s57
      %p68 = scmp.eq.s32.totalorder %s22, 0
      %p69 = por %p67, %p68
      %p70 = scmp.ne.s32.totalorder %s56, %s57
      %p71 = scmp.eq.s32.totalorder %s23, 1
      %p72 = por %p70, %p71
      %p74 = scmp.ne.s32.totalorder %s57, %s73
      %p75 = scmp.eq.s32.totalorder %s23, 0
      %p76 = por %p74, %p75
      %s77 = ssub.s32 %s17, %s24
      %p78 = scmp.eq.s32.totalorder %s77, 0
      %s80 = sadd.s32 %s79, 1
      %s81 = scalar_select %p78, %s79, %s80
      %p84 = pneg %p78
      %p85 = scmp.eq.s32.totalorder %s17, 1
      %p86 = por %p84, %p85
      %p87 = scmp.ne.s32.totalorder %s79, %s82
      %p88 = scmp.eq.s32.totalorder %s17, 0
      %p89 = por %p87, %p88
      %p90 = scmp.ne.s32.totalorder %s79, %s82
      %p91 = scmp.eq.s32.totalorder %s22, 1
      %p92 = por %p90, %p91
      %p93 = scmp.ne.s32.totalorder %s82, %s83
      %p94 = scmp.eq.s32.totalorder %s22, 0
      %p95 = por %p93, %p94
      %p96 = scmp.ne.s32.totalorder %s82, %s83
      %p97 = scmp.eq.s32.totalorder %s23, 1
      %p98 = por %p96, %p97
      %p100 = scmp.ne.s32.totalorder %s83, %s99
      %p101 = scmp.eq.s32.totalorder %s23, 0
      %p102 = por %p100, %p101
      %p103 = scmp.le.s32.totalorder 1, %s17
      %p104 = scmp.lt.s32.totalorder %s17, 3
      %p105 = pnand %p103, %p104
      %p106 = pneg %p105
      // Predicated region
      $region9: #{tpu_custom_call.1} parent=5 // pred_check
        _
      $region10: #{tpu_custom_call.1} parent=5 // pred_check_branch
        %108 = sbr.rel (%p105) target = $region12
      $region11: #{tpu_custom_call.1} parent=5 // pred_region
        %s109 = ssub.s32 %s17, 1
      $region12: #{tpu_custom_call.1} parent=5 // pred_fallthru
        _
      %p110 = scmp.lt.s32.totalorder %s17, 2
      // Predicated region
      $region13: #{tpu_custom_call.1} parent=5 // pred_check
        %p111 = pneg %p110
      $region14: #{tpu_custom_call.1} parent=5 // pred_check_branch
        %113 = sbr.rel (%p111) target = $region16
      $region15: #{tpu_custom_call.1} parent=5 // pred_region
        // Predicated region
        $region17: #{tpu_custom_call.1} parent=15 // pred_check
          %p114 = pneg %p37
        $region18: #{tpu_custom_call.1} parent=15 // pred_check_branch
          %116 = sbr.rel (%p114) target = $region20
        $region19: #{tpu_custom_call.1} parent=15 // pred_region
          %s117 = sand.u32 %s27, 1
          %s118 = scalar_lea.sflag [#allocation3], %s117
          %s119 = sand.u32 %s27, 1
          %s120 = smul.addr %s119, 12
          %s121 = scalar_lea.vmem [#allocation2], %s120
          %123 = vsyncadd %s118, 0
          %s124 = smul.addr %s17, 3
          %s125 = smul.addr %s124, 4
          %s126 = scalar_lea.hbm %s0, %s125
          %s128 = sshll.u32 %s126, 4
          %s129 = int_to_ptr.hbm [resolvable:$true] %s128
          %s130 = sshll.u32 %s121, 4
          %s131 = int_to_ptr.vmem [resolvable:$true] %s130
          %133 = dma.hbm_to_vmem [thread:$0]  %s129, 192, %s131, %s118
        $region20: #{tpu_custom_call.1} parent=15 // pred_fallthru
          _
        // Predicated region
        $region21: #{tpu_custom_call.1} parent=15 // pred_check
          %p134 = pneg %p63
        $region22: #{tpu_custom_call.1} parent=15 // pred_check_branch
          %136 = sbr.rel (%p134) target = $region24
        $region23: #{tpu_custom_call.1} parent=15 // pred_region
          %s137 = sand.u32 %s53, 1
          %s138 = scalar_lea.sflag [#allocation6], %s137
          %s139 = sand.u32 %s53, 1
          %s140 = smul.addr %s139, 16
          %s141 = scalar_lea.vmem [#allocation5], %s140
          %143 = vsyncadd %s138, 0
          %s144 = smul.addr %s17, 4
          %s145 = smul.addr %s144, 4
          %s146 = scalar_lea.hbm %s1, %s145
          %s148 = sshll.u32 %s146, 4
          %s149 = int_to_ptr.hbm [resolvable:$true] %s148
          %s150 = sshll.u32 %s141, 4
          %s151 = int_to_ptr.vmem [resolvable:$true] %s150
          %153 = dma.hbm_to_vmem [thread:$0]  %s149, 256, %s151, %s138
        $region24: #{tpu_custom_call.1} parent=15 // pred_fallthru
          _
      $region16: #{tpu_custom_call.1} parent=5 // pred_fallthru
        _
      %p154 = scmp.le.s32.totalorder 1, %s17
      %p155 = scmp.lt.s32.totalorder %s17, 3
      %p156 = pnand %p154, %p155
      %p157 = pneg %p156
      // Predicated region
      $region25: #{tpu_custom_call.1} parent=5 // pred_check
        _
      $region26: #{tpu_custom_call.1} parent=5 // pred_check_branch
        %159 = sbr.rel (%p156) target = $region28
      $region27: #{tpu_custom_call.1} parent=5 // pred_region
        %s160 = ssub.s32 %s17, 1
        %s161 = sand.u32 %s30, 1
        %s162 = scalar_lea.sflag [#allocation3], %s161
        %s163 = sand.u32 %s30, 1
        %s164 = smul.addr %s163, 12
        %s165 = scalar_lea.vmem [#allocation2], %s164
        // Predicated region
        $region29: #{tpu_custom_call.1} parent=27 // pred_check
          %p166 = pneg %p43
        $region30: #{tpu_custom_call.1} parent=27 // pred_check_branch
          %168 = sbr.rel (%p166) target = $region32
        $region31: #{tpu_custom_call.1} parent=27 // pred_region
          %170 = dma.done %s162, 192
        $region32: #{tpu_custom_call.1} parent=27 // pred_fallthru
          _
        %s171 = sand.u32 %s56, 1
        %s172 = scalar_lea.sflag [#allocation6], %s171
        %s173 = sand.u32 %s56, 1
        %s174 = smul.addr %s173, 16
        %s175 = scalar_lea.vmem [#allocation5], %s174
        // Predicated region
        $region33: #{tpu_custom_call.1} parent=27 // pred_check
          %p176 = pneg %p69
        $region34: #{tpu_custom_call.1} parent=27 // pred_check_branch
          %178 = sbr.rel (%p176) target = $region36
        $region35: #{tpu_custom_call.1} parent=27 // pred_region
          %180 = dma.done %s172, 256
        $region36: #{tpu_custom_call.1} parent=27 // pred_fallthru
          _
        %s181 = sand.u32 %s30, 1
        %s182 = scalar_lea.sflag [#allocation3], %s181
        %s183 = sand.u32 %s30, 1
        %s184 = smul.addr %s183, 12
        %s185 = scalar_lea.vmem [#allocation2], %s184
        %p186 = pneg %p43
        %p187 = pneg %p40
        %s188 = sand.u32 %s56, 1
        %s189 = scalar_lea.sflag [#allocation6], %s188
        %s190 = sand.u32 %s56, 1
        %s191 = smul.addr %s190, 16
        %s192 = scalar_lea.vmem [#allocation5], %s191
        %p193 = pneg %p69
        %p194 = pneg %p66
        %p195 = pneg %p95
        %p196 = pneg %p92
        %s197 = sand.u32 %s82, 1
        %s198 = scalar_lea.sflag [#allocation4], %s197
        %s199 = sand.u32 %s82, 1
        %s200 = smul.addr %s199, 3
        %s201 = scalar_lea.vmem [#allocation7], %s200
        %v202 = vld [vmem:[%s165] sm:$0xff]
        %v203 = vld [vmem:[%s165 + $0x8] sm:$0xf]
        %v204 = vld [vmem:[%s175] sm:$0xff]
        %v205 = vld [vmem:[%s175 + $0x8] sm:$0xff]
        %v206 = vsub.f32 %v202, %v204
        %v207 = vsub.f32 %v203, %v205
        %v208 = vand.u32 2147483647, %v206
        %v209 = vand.u32 2147483647, %v207
        %212 = vst [vmem:[#allocation1] ss:$2 sm:$0xff] %v208
        %s213 = scalar_lea.vmem [#allocation1], 16
        %214 = vst [vmem:[%s213] ss:$2 sm:$0xff] %v209
        %v215 = vld.sshfl [vmem:[#allocation1] sm:$0xff pattern:$0x75316420]
        %v216 = vld.sshfl [vmem:[#allocation1 + $0x8] sm:$0xff pattern:$0x75316420]
        %v217 = vld.sshfl [vmem:[#allocation1 + $0x10] sm:$0xff pattern:$0x75316420]
        %vm221 = vcmask 1043456
        %v222 = vsel %vm221, %v215, 0.0
        %v223 = vrot.slane %v222, 4
        %v224 = vadd.f32 %v222, %v223
        %v225 = vrot.slane %v224, 2
        %v226 = vadd.f32 %v224, %v225
        %v227 = vrot.slane %v226, 1
        %v228 = vadd.f32 %v226, %v227
        %v229 = vsel %vm221, %v216, 0.0
        %v230 = vrot.slane %v229, 4
        %v231 = vadd.f32 %v229, %v230
        %v232 = vrot.slane %v231, 2
        %v233 = vadd.f32 %v231, %v232
        %v234 = vrot.slane %v233, 1
        %v235 = vadd.f32 %v233, %v234
        %vm236 = vcmask 781312
        %v237 = vsel %vm236, %v217, 0.0
        %v238 = vrot.slane %v237, 4
        %v239 = vadd.f32 %v237, %v238
        %v240 = vrot.slane %v239, 2
        %v241 = vadd.f32 %v239, %v240
        %v242 = vrot.slane %v241, 1
        %v243 = vadd.f32 %v241, %v242
        %246 = vrot.lane.b32.xlu0 %v204, 127
        %v247 = vpop.permute.xlu0 %246
        %248 = vrot.lane.b32.xlu0 %v205, 127
        %v249 = vpop.permute.xlu0 %248
        %v250 = vrot.slane %v247, 4
        %v251 = vrot.slane %v249, 4
        %v252 = vsel %vm221, %v250, %v251
        %vm253 = vcmask 1039360
        %v254 = vsel %vm253, %v247, %v252
        %v257 = vsub.f32 %v202, %v254
        %v258 = vsub.f32 %v203, %v249
        %v259 = vand.u32 2147483647, %v257
        %v260 = vand.u32 2147483647, %v258
        %263 = vst [vmem:[#allocation1] ss:$2 sm:$0xff] %v259
        %s264 = scalar_lea.vmem [#allocation1], 16
        %265 = vst [vmem:[%s264] ss:$2 sm:$0xff] %v260
        %v266 = vld.sshfl [vmem:[#allocation1] sm:$0xff pattern:$0x75316420]
        %v267 = vld.sshfl [vmem:[#allocation1 + $0x8] sm:$0xff pattern:$0x75316420]
        %v268 = vld.sshfl [vmem:[#allocation1 + $0x10] sm:$0xff pattern:$0x75316420]
        %v272 = vsel %vm221, %v266, 0.0
        %v273 = vrot.slane %v272, 4
        %v274 = vadd.f32 %v272, %v273
        %v275 = vrot.slane %v274, 2
        %v276 = vadd.f32 %v274, %v275
        %v277 = vrot.slane %v276, 1
        %v278 = vadd.f32 %v276, %v277
        %v279 = vsel %vm221, %v267, 0.0
        %v280 = vrot.slane %v279, 4
        %v281 = vadd.f32 %v279, %v280
        %v282 = vrot.slane %v281, 2
        %v283 = vadd.f32 %v281, %v282
        %v284 = vrot.slane %v283, 1
        %v285 = vadd.f32 %v283, %v284
        %v286 = vsel %vm236, %v268, 0.0
        %v287 = vrot.slane %v286, 4
        %v288 = vadd.f32 %v286, %v287
        %v289 = vrot.slane %v288, 2
        %v290 = vadd.f32 %v288, %v289
        %v291 = vrot.slane %v290, 1
        %v292 = vadd.f32 %v290, %v291
        %v293 = vmin.f32 %v228, %v278
        %v294 = vmin.f32 %v235, %v285
        %v295 = vmin.f32 %v243, %v292
        %296 = vrot.lane.b32.xlu0 %v204, 126
        %v297 = vpop.permute.xlu0 %296
        %298 = vrot.lane.b32.xlu0 %v205, 126
        %v299 = vpop.permute.xlu0 %298
        %v300 = vrot.slane %v297, 4
        %v301 = vrot.slane %v299, 4
        %v302 = vsel %vm221, %v300, %v301
        %vm303 = vcmask 1031168
        %v304 = vsel %vm303, %v297, %v302
        %v307 = vsub.f32 %v202, %v304
        %v308 = vsub.f32 %v203, %v299
        %v309 = vand.u32 2147483647, %v307
        %v310 = vand.u32 2147483647, %v308
        %313 = vst [vmem:[#allocation1] ss:$2 sm:$0xff] %v309
        %s314 = scalar_lea.vmem [#allocation1], 16
        %315 = vst [vmem:[%s314] ss:$2 sm:$0xff] %v310
        %v316 = vld.sshfl [vmem:[#allocation1] sm:$0xff pattern:$0x75316420]
        %v317 = vld.sshfl [vmem:[#allocation1 + $0x8] sm:$0xff pattern:$0x75316420]
        %v318 = vld.sshfl [vmem:[#allocation1 + $0x10] sm:$0xff pattern:$0x75316420]
        %v322 = vsel %vm221, %v316, 0.0
        %v323 = vrot.slane %v322, 4
        %v324 = vadd.f32 %v322, %v323
        %v325 = vrot.slane %v324, 2
        %v326 = vadd.f32 %v324, %v325
        %v327 = vrot.slane %v326, 1
        %v328 = vadd.f32 %v326, %v327
        %v329 = vsel %vm221, %v317, 0.0
        %v330 = vrot.slane %v329, 4
        %v331 = vadd.f32 %v329, %v330
        %v332 = vrot.slane %v331, 2
        %v333 = vadd.f32 %v331, %v332
        %v334 = vrot.slane %v333, 1
        %v335 = vadd.f32 %v333, %v334
        %v336 = vsel %vm236, %v318, 0.0
        %v337 = vrot.slane %v336, 4
        %v338 = vadd.f32 %v336, %v337
        %v339 = vrot.slane %v338, 2
        %v340 = vadd.f32 %v338, %v339
        %v341 = vrot.slane %v340, 1
        %v342 = vadd.f32 %v340, %v341
        %v343 = vmin.f32 %v293, %v328
        %v344 = vmin.f32 %v294, %v335
        %v345 = vmin.f32 %v295, %v342
        %346 = vrot.lane.b32.xlu0 %v204, 125
        %v347 = vpop.permute.xlu0 %346
        %348 = vrot.lane.b32.xlu0 %v205, 125
        %v349 = vpop.permute.xlu0 %348
        %v350 = vrot.slane %v347, 4
        %v351 = vrot.slane %v349, 4
        %v352 = vsel %vm221, %v350, %v351
        %vm353 = vcmask 1022976
        %v354 = vsel %vm353, %v347, %v352
        %v357 = vsub.f32 %v202, %v354
        %v358 = vsub.f32 %v203, %v349
        %v359 = vand.u32 2147483647, %v357
        %v360 = vand.u32 2147483647, %v358
        %363 = vst [vmem:[#allocation1] ss:$2 sm:$0xff] %v359
        %s364 = scalar_lea.vmem [#allocation1], 16
        %365 = vst [vmem:[%s364] ss:$2 sm:$0xff] %v360
        %v366 = vld.sshfl [vmem:[#allocation1] sm:$0xff pattern:$0x75316420]
        %v367 = vld.sshfl [vmem:[#allocation1 + $0x8] sm:$0xff pattern:$0x75316420]
        %v368 = vld.sshfl [vmem:[#allocation1 + $0x10] sm:$0xff pattern:$0x75316420]
        %v372 = vsel %vm221, %v366, 0.0
        %v373 = vrot.slane %v372, 4
        %v374 = vadd.f32 %v372, %v373
        %v375 = vrot.slane %v374, 2
        %v376 = vadd.f32 %v374, %v375
        %v377 = vrot.slane %v376, 1
        %v378 = vadd.f32 %v376, %v377
        %v379 = vsel %vm221, %v367, 0.0
        %v380 = vrot.slane %v379, 4
        %v381 = vadd.f32 %v379, %v380
        %v382 = vrot.slane %v381, 2
        %v383 = vadd.f32 %v381, %v382
        %v384 = vrot.slane %v383, 1
        %v385 = vadd.f32 %v383, %v384
        %v386 = vsel %vm236, %v368, 0.0
        %v387 = vrot.slane %v386, 4
        %v388 = vadd.f32 %v386, %v387
        %v389 = vrot.slane %v388, 2
        %v390 = vadd.f32 %v388, %v389
        %v391 = vrot.slane %v390, 1
        %v392 = vadd.f32 %v390, %v391
        %v393 = vmin.f32 %v343, %v378
        %v394 = vmin.f32 %v344, %v385
        %v395 = vmin.f32 %v345, %v392
        %396 = vrot.lane.b32.xlu0 %v204, 124
        %v397 = vpop.permute.xlu0 %396
        %398 = vrot.lane.b32.xlu0 %v205, 124
        %v399 = vpop.permute.xlu0 %398
        %v400 = vrot.slane %v397, 4
        %v401 = vrot.slane %v399, 4
        %v402 = vsel %vm221, %v400, %v401
        %vm403 = vcmask 1014784
        %v404 = vsel %vm403, %v397, %v402
        %v407 = vsub.f32 %v202, %v404
        %v408 = vsub.f32 %v203, %v399
        %v409 = vand.u32 2147483647, %v407
        %v410 = vand.u32 2147483647, %v408
        %413 = vst [vmem:[#allocation1] ss:$2 sm:$0xff] %v409
        %s414 = scalar_lea.vmem [#allocation1], 16
        %415 = vst [vmem:[%s414] ss:$2 sm:$0xff] %v410
        %v416 = vld.sshfl [vmem:[#allocation1] sm:$0xff pattern:$0x75316420]
        %v417 = vld.sshfl [vmem:[#allocation1 + $0x8] sm:$0xff pattern:$0x75316420]
        %v418 = vld.sshfl [vmem:[#allocation1 + $0x10] sm:$0xff pattern:$0x75316420]
        %v422 = vsel %vm221, %v416, 0.0
        %v423 = vrot.slane %v422, 4
        %v424 = vadd.f32 %v422, %v423
        %v425 = vrot.slane %v424, 2
        %v426 = vadd.f32 %v424, %v425
        %v427 = vrot.slane %v426, 1
        %v428 = vadd.f32 %v426, %v427
        %v429 = vsel %vm221, %v417, 0.0
        %v430 = vrot.slane %v429, 4
        %v431 = vadd.f32 %v429, %v430
        %v432 = vrot.slane %v431, 2
        %v433 = vadd.f32 %v431, %v432
        %v434 = vrot.slane %v433, 1
        %v435 = vadd.f32 %v433, %v434
        %v436 = vsel %vm236, %v418, 0.0
        %v437 = vrot.slane %v436, 4
        %v438 = vadd.f32 %v436, %v437
        %v439 = vrot.slane %v438, 2
        %v440 = vadd.f32 %v438, %v439
        %v441 = vrot.slane %v440, 1
        %v442 = vadd.f32 %v440, %v441
        %v443 = vmin.f32 %v393, %v428
        %v444 = vmin.f32 %v394, %v435
        %v445 = vmin.f32 %v395, %v442
        %446 = vrot.lane.b32.xlu0 %v204, 123
        %v447 = vpop.permute.xlu0 %446
        %448 = vrot.lane.b32.xlu0 %v205, 123
        %v449 = vpop.permute.xlu0 %448
        %v450 = vrot.slane %v447, 4
        %v451 = vrot.slane %v449, 4
        %v452 = vsel %vm221, %v450, %v451
        %vm453 = vcmask 1006592
        %v454 = vsel %vm453, %v447, %v452
        %v457 = vsub.f32 %v202, %v454
        %v458 = vsub.f32 %v203, %v449
        %v459 = vand.u32 2147483647, %v457
        %v460 = vand.u32 2147483647, %v458
        %463 = vst [vmem:[#allocation1] ss:$2 sm:$0xff] %v459
        %s464 = scalar_lea.vmem [#allocation1], 16
        %465 = vst [vmem:[%s464] ss:$2 sm:$0xff] %v460
        %v466 = vld.sshfl [vmem:[#allocation1] sm:$0xff pattern:$0x75316420]
        %v467 = vld.sshfl [vmem:[#allocation1 + $0x8] sm:$0xff pattern:$0x75316420]
        %v468 = vld.sshfl [vmem:[#allocation1 + $0x10] sm:$0xff pattern:$0x75316420]
        %v472 = vsel %vm221, %v466, 0.0
        %v473 = vrot.slane %v472, 4
        %v474 = vadd.f32 %v472, %v473
        %v475 = vrot.slane %v474, 2
        %v476 = vadd.f32 %v474, %v475
        %v477 = vrot.slane %v476, 1
        %v478 = vadd.f32 %v476, %v477
        %v479 = vsel %vm221, %v467, 0.0
        %v480 = vrot.slane %v479, 4
        %v481 = vadd.f32 %v479, %v480
        %v482 = vrot.slane %v481, 2
        %v483 = vadd.f32 %v481, %v482
        %v484 = vrot.slane %v483, 1
        %v485 = vadd.f32 %v483, %v484
        %v486 = vsel %vm236, %v468, 0.0
        %v487 = vrot.slane %v486, 4
        %v488 = vadd.f32 %v486, %v487
        %v489 = vrot.slane %v488, 2
        %v490 = vadd.f32 %v488, %v489
        %v491 = vrot.slane %v490, 1
        %v492 = vadd.f32 %v490, %v491
        %v493 = vmin.f32 %v443, %v478
        %v494 = vmin.f32 %v444, %v485
        %v495 = vmin.f32 %v445, %v492
        %496 = vrot.lane.b32.xlu0 %v204, 122
        %v497 = vpop.permute.xlu0 %496
        %498 = vrot.lane.b32.xlu0 %v205, 122
        %v499 = vpop.permute.xlu0 %498
        %v500 = vrot.slane %v497, 4
        %v501 = vrot.slane %v499, 4
        %v502 = vsel %vm221, %v500, %v501
        %vm503 = vcmask 998400
        %v504 = vsel %vm503, %v497, %v502
        %v507 = vsub.f32 %v202, %v504
        %v508 = vsub.f32 %v203, %v499
        %v509 = vand.u32 2147483647, %v507
        %v510 = vand.u32 2147483647, %v508
        %513 = vst [vmem:[#allocation1] ss:$2 sm:$0xff] %v509
        %s514 = scalar_lea.vmem [#allocation1], 16
        %515 = vst [vmem:[%s514] ss:$2 sm:$0xff] %v510
        %v516 = vld.sshfl [vmem:[#allocation1] sm:$0xff pattern:$0x75316420]
        %v517 = vld.sshfl [vmem:[#allocation1 + $0x8] sm:$0xff pattern:$0x75316420]
        %v518 = vld.sshfl [vmem:[#allocation1 + $0x10] sm:$0xff pattern:$0x75316420]
        %v522 = vsel %vm221, %v516, 0.0
        %v523 = vrot.slane %v522, 4
        %v524 = vadd.f32 %v522, %v523
        %v525 = vrot.slane %v524, 2
        %v526 = vadd.f32 %v524, %v525
        %v527 = vrot.slane %v526, 1
        %v528 = vadd.f32 %v526, %v527
        %v529 = vsel %vm221, %v517, 0.0
        %v530 = vrot.slane %v529, 4
        %v531 = vadd.f32 %v529, %v530
        %v532 = vrot.slane %v531, 2
        %v533 = vadd.f32 %v531, %v532
        %v534 = vrot.slane %v533, 1
        %v535 = vadd.f32 %v533, %v534
        %v536 = vsel %vm236, %v518, 0.0
        %v537 = vrot.slane %v536, 4
        %v538 = vadd.f32 %v536, %v537
        %v539 = vrot.slane %v538, 2
        %v540 = vadd.f32 %v538, %v539
        %v541 = vrot.slane %v540, 1
        %v542 = vadd.f32 %v540, %v541
        %v543 = vmin.f32 %v493, %v528
        %v544 = vmin.f32 %v494, %v535
        %v545 = vmin.f32 %v495, %v542
        %546 = vrot.lane.b32.xlu0 %v204, 106
        %v547 = vpop.permute.xlu0 %546
        %548 = vrot.lane.b32.xlu0 %v205, 106
        %v549 = vpop.permute.xlu0 %548
        %v550 = vrot.slane %v547, 4
        %v551 = vrot.slane %v549, 4
        %v552 = vsel %vm221, %v550, %v551
        %vm553 = vcmask 867328
        %v554 = vsel %vm553, %v547, %v552
        %v557 = vsub.f32 %v202, %v554
        %v558 = vsub.f32 %v203, %v549
        %v559 = vand.u32 2147483647, %v557
        %v560 = vand.u32 2147483647, %v558
        %563 = vst [vmem:[#allocation1] ss:$2 sm:$0xff] %v559
        %s564 = scalar_lea.vmem [#allocation1], 16
        %565 = vst [vmem:[%s564] ss:$2 sm:$0xff] %v560
        %v566 = vld.sshfl [vmem:[#allocation1] sm:$0xff pattern:$0x75316420]
        %v567 = vld.sshfl [vmem:[#allocation1 + $0x8] sm:$0xff pattern:$0x75316420]
        %v568 = vld.sshfl [vmem:[#allocation1 + $0x10] sm:$0xff pattern:$0x75316420]
        %v572 = vsel %vm221, %v566, 0.0
        %v573 = vrot.slane %v572, 4
        %v574 = vadd.f32 %v572, %v573
        %v575 = vrot.slane %v574, 2
        %v576 = vadd.f32 %v574, %v575
        %v577 = vrot.slane %v576, 1
        %v578 = vadd.f32 %v576, %v577
        %v579 = vsel %vm221, %v567, 0.0
        %v580 = vrot.slane %v579, 4
        %v581 = vadd.f32 %v579, %v580
        %v582 = vrot.slane %v581, 2
        %v583 = vadd.f32 %v581, %v582
        %v584 = vrot.slane %v583, 1
        %v585 = vadd.f32 %v583, %v584
        %v586 = vsel %vm236, %v568, 0.0
        %v587 = vrot.slane %v586, 4
        %v588 = vadd.f32 %v586, %v587
        %v589 = vrot.slane %v588, 2
        %v590 = vadd.f32 %v588, %v589
        %v591 = vrot.slane %v590, 1
        %v592 = vadd.f32 %v590, %v591
        %v593 = vmin.f32 %v543, %v578
        %v594 = vmin.f32 %v544, %v585
        %v595 = vmin.f32 %v545, %v592
        %596 = vrot.lane.b32.xlu0 %v204, 105
        %v597 = vpop.permute.xlu0 %596
        %598 = vrot.lane.b32.xlu0 %v205, 105
        %v599 = vpop.permute.xlu0 %598
        %v600 = vrot.slane %v597, 4
        %v601 = vrot.slane %v599, 4
        %v602 = vsel %vm221, %v600, %v601
        %vm603 = vcmask 859136
        %v604 = vsel %vm603, %v597, %v602
        %v607 = vsub.f32 %v202, %v604
        %v608 = vsub.f32 %v203, %v599
        %v609 = vand.u32 2147483647, %v607
        %v610 = vand.u32 2147483647, %v608
        %613 = vst [vmem:[#allocation1] ss:$2 sm:$0xff] %v609
        %s614 = scalar_lea.vmem [#allocation1], 16
        %615 = vst [vmem:[%s614] ss:$2 sm:$0xff] %v610
        %v616 = vld.sshfl [vmem:[#allocation1] sm:$0xff pattern:$0x75316420]
        %v617 = vld.sshfl [vmem:[#allocation1 + $0x8] sm:$0xff pattern:$0x75316420]
        %v618 = vld.sshfl [vmem:[#allocation1 + $0x10] sm:$0xff pattern:$0x75316420]
        %v622 = vsel %vm221, %v616, 0.0
        %v623 = vrot.slane %v622, 4
        %v624 = vadd.f32 %v622, %v623
        %v625 = vrot.slane %v624, 2
        %v626 = vadd.f32 %v624, %v625
        %v627 = vrot.slane %v626, 1
        %v628 = vadd.f32 %v626, %v627
        %v629 = vsel %vm221, %v617, 0.0
        %v630 = vrot.slane %v629, 4
        %v631 = vadd.f32 %v629, %v630
        %v632 = vrot.slane %v631, 2
        %v633 = vadd.f32 %v631, %v632
        %v634 = vrot.slane %v633, 1
        %v635 = vadd.f32 %v633, %v634
        %v636 = vsel %vm236, %v618, 0.0
        %v637 = vrot.slane %v636, 4
        %v638 = vadd.f32 %v636, %v637
        %v639 = vrot.slane %v638, 2
        %v640 = vadd.f32 %v638, %v639
        %v641 = vrot.slane %v640, 1
        %v642 = vadd.f32 %v640, %v641
        %v643 = vmin.f32 %v593, %v628
        %v644 = vmin.f32 %v594, %v635
        %v645 = vmin.f32 %v595, %v642
        %646 = vrot.lane.b32.xlu0 %v204, 104
        %v647 = vpop.permute.xlu0 %646
        %648 = vrot.lane.b32.xlu0 %v205, 104
        %v649 = vpop.permute.xlu0 %648
        %v650 = vrot.slane %v647, 4
        %v651 = vrot.slane %v649, 4
        %v652 = vsel %vm221, %v650, %v651
        %vm653 = vcmask 850944
        %v654 = vsel %vm653, %v647, %v652
        %v657 = vsub.f32 %v202, %v654
        %v658 = vsub.f32 %v203, %v649
        %v659 = vand.u32 2147483647, %v657
        %v660 = vand.u32 2147483647, %v658
        %663 = vst [vmem:[#allocation1] ss:$2 sm:$0xff] %v659
        %s664 = scalar_lea.vmem [#allocation1], 16
        %665 = vst [vmem:[%s664] ss:$2 sm:$0xff] %v660
        %v666 = vld.sshfl [vmem:[#allocation1] sm:$0xff pattern:$0x75316420]
        %v667 = vld.sshfl [vmem:[#allocation1 + $0x8] sm:$0xff pattern:$0x75316420]
        %v668 = vld.sshfl [vmem:[#allocation1 + $0x10] sm:$0xff pattern:$0x75316420]
        %v672 = vsel %vm221, %v666, 0.0
        %v673 = vrot.slane %v672, 4
        %v674 = vadd.f32 %v672, %v673
        %v675 = vrot.slane %v674, 2
        %v676 = vadd.f32 %v674, %v675
        %v677 = vrot.slane %v676, 1
        %v678 = vadd.f32 %v676, %v677
        %v679 = vsel %vm221, %v667, 0.0
        %v680 = vrot.slane %v679, 4
        %v681 = vadd.f32 %v679, %v680
        %v682 = vrot.slane %v681, 2
        %v683 = vadd.f32 %v681, %v682
        %v684 = vrot.slane %v683, 1
        %v685 = vadd.f32 %v683, %v684
        %v686 = vsel %vm236, %v668, 0.0
        %v687 = vrot.slane %v686, 4
        %v688 = vadd.f32 %v686, %v687
        %v689 = vrot.slane %v688, 2
        %v690 = vadd.f32 %v688, %v689
        %v691 = vrot.slane %v690, 1
        %v692 = vadd.f32 %v690, %v691
        %v693 = vmin.f32 %v643, %v678
        %v694 = vmin.f32 %v644, %v685
        %v695 = vmin.f32 %v645, %v692
        %696 = vrot.lane.b32.xlu0 %v204, 103
        %v697 = vpop.permute.xlu0 %696
        %698 = vrot.lane.b32.xlu0 %v205, 103
        %v699 = vpop.permute.xlu0 %698
        %v700 = vrot.slane %v697, 4
        %v701 = vrot.slane %v699, 4
        %v702 = vsel %vm221, %v700, %v701
        %vm703 = vcmask 842752
        %v704 = vsel %vm703, %v697, %v702
        %v707 = vsub.f32 %v202, %v704
        %v708 = vsub.f32 %v203, %v699
        %v709 = vand.u32 2147483647, %v707
        %v710 = vand.u32 2147483647, %v708
        %713 = vst [vmem:[#allocation1] ss:$2 sm:$0xff] %v709
        %s714 = scalar_lea.vmem [#allocation1], 16
        %715 = vst [vmem:[%s714] ss:$2 sm:$0xff] %v710
        %v716 = vld.sshfl [vmem:[#allocation1] sm:$0xff pattern:$0x75316420]
        %v717 = vld.sshfl [vmem:[#allocation1 + $0x8] sm:$0xff pattern:$0x75316420]
        %v718 = vld.sshfl [vmem:[#allocation1 + $0x10] sm:$0xff pattern:$0x75316420]
        %v722 = vsel %vm221, %v716, 0.0
        %v723 = vrot.slane %v722, 4
        %v724 = vadd.f32 %v722, %v723
        %v725 = vrot.slane %v724, 2
        %v726 = vadd.f32 %v724, %v725
        %v727 = vrot.slane %v726, 1
        %v728 = vadd.f32 %v726, %v727
        %v729 = vsel %vm221, %v717, 0.0
        %v730 = vrot.slane %v729, 4
        %v731 = vadd.f32 %v729, %v730
        %v732 = vrot.slane %v731, 2
        %v733 = vadd.f32 %v731, %v732
        %v734 = vrot.slane %v733, 1
        %v735 = vadd.f32 %v733, %v734
        %v736 = vsel %vm236, %v718, 0.0
        %v737 = vrot.slane %v736, 4
        %v738 = vadd.f32 %v736, %v737
        %v739 = vrot.slane %v738, 2
        %v740 = vadd.f32 %v738, %v739
        %v741 = vrot.slane %v740, 1
        %v742 = vadd.f32 %v740, %v741
        %v743 = vmin.f32 %v693, %v728
        %v744 = vmin.f32 %v694, %v735
        %v745 = vmin.f32 %v695, %v742
        %746 = vrot.lane.b32.xlu0 %v204, 102
        %v747 = vpop.permute.xlu0 %746
        %748 = vrot.lane.b32.xlu0 %v205, 102
        %v749 = vpop.permute.xlu0 %748
        %v750 = vrot.slane %v747, 4
        %v751 = vrot.slane %v749, 4
        %v752 = vsel %vm221, %v750, %v751
        %vm753 = vcmask 834560
        %v754 = vsel %vm753, %v747, %v752
        %v757 = vsub.f32 %v202, %v754
        %v758 = vsub.f32 %v203, %v749
        %v759 = vand.u32 2147483647, %v757
        %v760 = vand.u32 2147483647, %v758
        %763 = vst [vmem:[#allocation1] ss:$2 sm:$0xff] %v759
        %s764 = scalar_lea.vmem [#allocation1], 16
        %765 = vst [vmem:[%s764] ss:$2 sm:$0xff] %v760
        %v766 = vld.sshfl [vmem:[#allocation1] sm:$0xff pattern:$0x75316420]
        %v767 = vld.sshfl [vmem:[#allocation1 + $0x8] sm:$0xff pattern:$0x75316420]
        %v768 = vld.sshfl [vmem:[#allocation1 + $0x10] sm:$0xff pattern:$0x75316420]
        %v772 = vsel %vm221, %v766, 0.0
        %v773 = vrot.slane %v772, 4
        %v774 = vadd.f32 %v772, %v773
        %v775 = vrot.slane %v774, 2
        %v776 = vadd.f32 %v774, %v775
        %v777 = vrot.slane %v776, 1
        %v778 = vadd.f32 %v776, %v777
        %v779 = vsel %vm221, %v767, 0.0
        %v780 = vrot.slane %v779, 4
        %v781 = vadd.f32 %v779, %v780
        %v782 = vrot.slane %v781, 2
        %v783 = vadd.f32 %v781, %v782
        %v784 = vrot.slane %v783, 1
        %v785 = vadd.f32 %v783, %v784
        %v786 = vsel %vm236, %v768, 0.0
        %v787 = vrot.slane %v786, 4
        %v788 = vadd.f32 %v786, %v787
        %v789 = vrot.slane %v788, 2
        %v790 = vadd.f32 %v788, %v789
        %v791 = vrot.slane %v790, 1
        %v792 = vadd.f32 %v790, %v791
        %v793 = vmin.f32 %v743, %v778
        %v794 = vmin.f32 %v744, %v785
        %v795 = vmin.f32 %v745, %v792
        %796 = vrot.lane.b32.xlu0 %v204, 101
        %v797 = vpop.permute.xlu0 %796
        %798 = vrot.lane.b32.xlu0 %v205, 101
        %v799 = vpop.permute.xlu0 %798
        %v800 = vrot.slane %v797, 4
        %v801 = vrot.slane %v799, 4
        %v802 = vsel %vm221, %v800, %v801
        %vm803 = vcmask 826368
        %v804 = vsel %vm803, %v797, %v802
        %v807 = vsub.f32 %v202, %v804
        %v808 = vsub.f32 %v203, %v799
        %v809 = vand.u32 2147483647, %v807
        %v810 = vand.u32 2147483647, %v808
        %813 = vst [vmem:[#allocation1] ss:$2 sm:$0xff] %v809
        %s814 = scalar_lea.vmem [#allocation1], 16
        %815 = vst [vmem:[%s814] ss:$2 sm:$0xff] %v810
        %v816 = vld.sshfl [vmem:[#allocation1] sm:$0xff pattern:$0x75316420]
        %v817 = vld.sshfl [vmem:[#allocation1 + $0x8] sm:$0xff pattern:$0x75316420]
        %v818 = vld.sshfl [vmem:[#allocation1 + $0x10] sm:$0xff pattern:$0x75316420]
        %v822 = vsel %vm221, %v816, 0.0
        %v823 = vrot.slane %v822, 4
        %v824 = vadd.f32 %v822, %v823
        %v825 = vrot.slane %v824, 2
        %v826 = vadd.f32 %v824, %v825
        %v827 = vrot.slane %v826, 1
        %v828 = vadd.f32 %v826, %v827
        %v829 = vsel %vm221, %v817, 0.0
        %v830 = vrot.slane %v829, 4
        %v831 = vadd.f32 %v829, %v830
        %v832 = vrot.slane %v831, 2
        %v833 = vadd.f32 %v831, %v832
        %v834 = vrot.slane %v833, 1
        %v835 = vadd.f32 %v833, %v834
        %v836 = vsel %vm236, %v818, 0.0
        %v837 = vrot.slane %v836, 4
        %v838 = vadd.f32 %v836, %v837
        %v839 = vrot.slane %v838, 2
        %v840 = vadd.f32 %v838, %v839
        %v841 = vrot.slane %v840, 1
        %v842 = vadd.f32 %v840, %v841
        %v843 = vmin.f32 %v793, %v828
        %v844 = vmin.f32 %v794, %v835
        %v845 = vmin.f32 %v795, %v842
        %846 = vrot.lane.b32.xlu0 %v204, 100
        %v847 = vpop.permute.xlu0 %846
        %848 = vrot.lane.b32.xlu0 %v205, 100
        %v849 = vpop.permute.xlu0 %848
        %v850 = vrot.slane %v847, 4
        %v851 = vrot.slane %v849, 4
        %v852 = vsel %vm221, %v850, %v851
        %vm853 = vcmask 818176
        %v854 = vsel %vm853, %v847, %v852
        %v857 = vsub.f32 %v202, %v854
        %v858 = vsub.f32 %v203, %v849
        %v859 = vand.u32 2147483647, %v857
        %v860 = vand.u32 2147483647, %v858
        %863 = vst [vmem:[#allocation1] ss:$2 sm:$0xff] %v859
        %s864 = scalar_lea.vmem [#allocation1], 16
        %865 = vst [vmem:[%s864] ss:$2 sm:$0xff] %v860
        %v866 = vld.sshfl [vmem:[#allocation1] sm:$0xff pattern:$0x75316420]
        %v867 = vld.sshfl [vmem:[#allocation1 + $0x8] sm:$0xff pattern:$0x75316420]
        %v868 = vld.sshfl [vmem:[#allocation1 + $0x10] sm:$0xff pattern:$0x75316420]
        %v872 = vsel %vm221, %v866, 0.0
        %v873 = vrot.slane %v872, 4
        %v874 = vadd.f32 %v872, %v873
        %v875 = vrot.slane %v874, 2
        %v876 = vadd.f32 %v874, %v875
        %v877 = vrot.slane %v876, 1
        %v878 = vadd.f32 %v876, %v877
        %v879 = vsel %vm221, %v867, 0.0
        %v880 = vrot.slane %v879, 4
        %v881 = vadd.f32 %v879, %v880
        %v882 = vrot.slane %v881, 2
        %v883 = vadd.f32 %v881, %v882
        %v884 = vrot.slane %v883, 1
        %v885 = vadd.f32 %v883, %v884
        %v886 = vsel %vm236, %v868, 0.0
        %v887 = vrot.slane %v886, 4
        %v888 = vadd.f32 %v886, %v887
        %v889 = vrot.slane %v888, 2
        %v890 = vadd.f32 %v888, %v889
        %v891 = vrot.slane %v890, 1
        %v892 = vadd.f32 %v890, %v891
        %v893 = vmin.f32 %v843, %v878
        %v894 = vmin.f32 %v844, %v885
        %v895 = vmin.f32 %v845, %v892
        %896 = vrot.lane.b32.xlu0 %v204, 84
        %v897 = vpop.permute.xlu0 %896
        %898 = vrot.lane.b32.xlu0 %v205, 84
        %v899 = vpop.permute.xlu0 %898
        %v900 = vrot.slane %v897, 4
        %v901 = vrot.slane %v899, 4
        %v902 = vsel %vm221, %v900, %v901
        %vm903 = vcmask 687104
        %v904 = vsel %vm903, %v897, %v902
        %v905 = vsel %vm903, %v899, %v901
        %v908 = vsub.f32 %v202, %v904
        %v909 = vsub.f32 %v203, %v905
        %v910 = vand.u32 2147483647, %v908
        %v911 = vand.u32 2147483647, %v909
        %914 = vst [vmem:[#allocation1] ss:$2 sm:$0xff] %v910
        %s915 = scalar_lea.vmem [#allocation1], 16
        %916 = vst [vmem:[%s915] ss:$2 sm:$0xff] %v911
        %v917 = vld.sshfl [vmem:[#allocation1] sm:$0xff pattern:$0x75316420]
        %v918 = vld.sshfl [vmem:[#allocation1 + $0x8] sm:$0xff pattern:$0x75316420]
        %v919 = vld.sshfl [vmem:[#allocation1 + $0x10] sm:$0xff pattern:$0x75316420]
        %v923 = vsel %vm221, %v917, 0.0
        %v924 = vrot.slane %v923, 4
        %v925 = vadd.f32 %v923, %v924
        %v926 = vrot.slane %v925, 2
        %v927 = vadd.f32 %v925, %v926
        %v928 = vrot.slane %v927, 1
        %v929 = vadd.f32 %v927, %v928
        %v930 = vsel %vm221, %v918, 0.0
        %v931 = vrot.slane %v930, 4
        %v932 = vadd.f32 %v930, %v931
        %v933 = vrot.slane %v932, 2
        %v934 = vadd.f32 %v932, %v933
        %v935 = vrot.slane %v934, 1
        %v936 = vadd.f32 %v934, %v935
        %v937 = vsel %vm236, %v919, 0.0
        %v938 = vrot.slane %v937, 4
        %v939 = vadd.f32 %v937, %v938
        %v940 = vrot.slane %v939, 2
        %v941 = vadd.f32 %v939, %v940
        %v942 = vrot.slane %v941, 1
        %v943 = vadd.f32 %v941, %v942
        %v944 = vmin.f32 %v893, %v929
        %v945 = vmin.f32 %v894, %v936
        %v946 = vmin.f32 %v895, %v943
        %947 = vrot.lane.b32.xlu0 %v204, 83
        %v948 = vpop.permute.xlu0 %947
        %949 = vrot.lane.b32.xlu0 %v205, 83
        %v950 = vpop.permute.xlu0 %949
        %v951 = vrot.slane %v948, 4
        %v952 = vrot.slane %v950, 4
        %v953 = vsel %vm221, %v951, %v952
        %vm954 = vcmask 678912
        %v955 = vsel %vm954, %v948, %v953
        %v956 = vsel %vm954, %v950, %v952
        %v959 = vsub.f32 %v202, %v955
        %v960 = vsub.f32 %v203, %v956
        %v961 = vand.u32 2147483647, %v959
        %v962 = vand.u32 2147483647, %v960
        %965 = vst [vmem:[#allocation1] ss:$2 sm:$0xff] %v961
        %s966 = scalar_lea.vmem [#allocation1], 16
        %967 = vst [vmem:[%s966] ss:$2 sm:$0xff] %v962
        %v968 = vld.sshfl [vmem:[#allocation1] sm:$0xff pattern:$0x75316420]
        %v969 = vld.sshfl [vmem:[#allocation1 + $0x8] sm:$0xff pattern:$0x75316420]
        %v970 = vld.sshfl [vmem:[#allocation1 + $0x10] sm:$0xff pattern:$0x75316420]
        %v974 = vsel %vm221, %v968, 0.0
        %v975 = vrot.slane %v974, 4
        %v976 = vadd.f32 %v974, %v975
        %v977 = vrot.slane %v976, 2
        %v978 = vadd.f32 %v976, %v977
        %v979 = vrot.slane %v978, 1
        %v980 = vadd.f32 %v978, %v979
        %v981 = vsel %vm221, %v969, 0.0
        %v982 = vrot.slane %v981, 4
        %v983 = vadd.f32 %v981, %v982
        %v984 = vrot.slane %v983, 2
        %v985 = vadd.f32 %v983, %v984
        %v986 = vrot.slane %v985, 1
        %v987 = vadd.f32 %v985, %v986
        %v988 = vsel %vm236, %v970, 0.0
        %v989 = vrot.slane %v988, 4
        %v990 = vadd.f32 %v988, %v989
        %v991 = vrot.slane %v990, 2
        %v992 = vadd.f32 %v990, %v991
        %v993 = vrot.slane %v992, 1
        %v994 = vadd.f32 %v992, %v993
        %v995 = vmin.f32 %v944, %v980
        %v996 = vmin.f32 %v945, %v987
        %v997 = vmin.f32 %v946, %v994
        %998 = vrot.lane.b32.xlu0 %v204, 82
        %v999 = vpop.permute.xlu0 %998
        %1000 = vrot.lane.b32.xlu0 %v205, 82
        %v1001 = vpop.permute.xlu0 %1000
        %v1002 = vrot.slane %v999, 4
        %v1003 = vrot.slane %v1001, 4
        %v1004 = vsel %vm221, %v1002, %v1003
        %vm1005 = vcmask 670720
        %v1006 = vsel %vm1005, %v999, %v1004
        %v1007 = vsel %vm1005, %v1001, %v1003
        %v1010 = vsub.f32 %v202, %v1006
        %v1011 = vsub.f32 %v203, %v1007
        %v1012 = vand.u32 2147483647, %v1010
        %v1013 = vand.u32 2147483647, %v1011
        %1016 = vst [vmem:[#allocation1] ss:$2 sm:$0xff] %v1012
        %s1017 = scalar_lea.vmem [#allocation1], 16
        %1018 = vst [vmem:[%s1017] ss:$2 sm:$0xff] %v1013
        %v1019 = vld.sshfl [vmem:[#allocation1] sm:$0xff pattern:$0x75316420]
        %v1020 = vld.sshfl [vmem:[#allocation1 + $0x8] sm:$0xff pattern:$0x75316420]
        %v1021 = vld.sshfl [vmem:[#allocation1 + $0x10] sm:$0xff pattern:$0x75316420]
        %v1025 = vsel %vm221, %v1019, 0.0
        %v1026 = vrot.slane %v1025, 4
        %v1027 = vadd.f32 %v1025, %v1026
        %v1028 = vrot.slane %v1027, 2
        %v1029 = vadd.f32 %v1027, %v1028
        %v1030 = vrot.slane %v1029, 1
        %v1031 = vadd.f32 %v1029, %v1030
        %v1032 = vsel %vm221, %v1020, 0.0
        %v1033 = vrot.slane %v1032, 4
        %v1034 = vadd.f32 %v1032, %v1033
        %v1035 = vrot.slane %v1034, 2
        %v1036 = vadd.f32 %v1034, %v1035
        %v1037 = vrot.slane %v1036, 1
        %v1038 = vadd.f32 %v1036, %v1037
        %v1039 = vsel %vm236, %v1021, 0.0
        %v1040 = vrot.slane %v1039, 4
        %v1041 = vadd.f32 %v1039, %v1040
        %v1042 = vrot.slane %v1041, 2
        %v1043 = vadd.f32 %v1041, %v1042
        %v1044 = vrot.slane %v1043, 1
        %v1045 = vadd.f32 %v1043, %v1044
        %v1046 = vmin.f32 %v995, %v1031
        %v1047 = vmin.f32 %v996, %v1038
        %v1048 = vmin.f32 %v997, %v1045
        %1049 = vrot.lane.b32.xlu0 %v204, 81
        %v1050 = vpop.permute.xlu0 %1049
        %1051 = vrot.lane.b32.xlu0 %v205, 81
        %v1052 = vpop.permute.xlu0 %1051
        %v1053 = vrot.slane %v1050, 4
        %v1054 = vrot.slane %v1052, 4
        %v1055 = vsel %vm221, %v1053, %v1054
        %vm1056 = vcmask 662528
        %v1057 = vsel %vm1056, %v1050, %v1055
        %v1058 = vsel %vm1056, %v1052, %v1054
        %v1061 = vsub.f32 %v202, %v1057
        %v1062 = vsub.f32 %v203, %v1058
        %v1063 = vand.u32 2147483647, %v1061
        %v1064 = vand.u32 2147483647, %v1062
        %1067 = vst [vmem:[#allocation1] ss:$2 sm:$0xff] %v1063
        %s1068 = scalar_lea.vmem [#allocation1], 16
        %1069 = vst [vmem:[%s1068] ss:$2 sm:$0xff] %v1064
        %v1070 = vld.sshfl [vmem:[#allocation1] sm:$0xff pattern:$0x75316420]
        %v1071 = vld.sshfl [vmem:[#allocation1 + $0x8] sm:$0xff pattern:$0x75316420]
        %v1072 = vld.sshfl [vmem:[#allocation1 + $0x10] sm:$0xff pattern:$0x75316420]
        %v1076 = vsel %vm221, %v1070, 0.0
        %v1077 = vrot.slane %v1076, 4
        %v1078 = vadd.f32 %v1076, %v1077
        %v1079 = vrot.slane %v1078, 2
        %v1080 = vadd.f32 %v1078, %v1079
        %v1081 = vrot.slane %v1080, 1
        %v1082 = vadd.f32 %v1080, %v1081
        %v1083 = vsel %vm221, %v1071, 0.0
        %v1084 = vrot.slane %v1083, 4
        %v1085 = vadd.f32 %v1083, %v1084
        %v1086 = vrot.slane %v1085, 2
        %v1087 = vadd.f32 %v1085, %v1086
        %v1088 = vrot.slane %v1087, 1
        %v1089 = vadd.f32 %v1087, %v1088
        %v1090 = vsel %vm236, %v1072, 0.0
        %v1091 = vrot.slane %v1090, 4
        %v1092 = vadd.f32 %v1090, %v1091
        %v1093 = vrot.slane %v1092, 2
        %v1094 = vadd.f32 %v1092, %v1093
        %v1095 = vrot.slane %v1094, 1
        %v1096 = vadd.f32 %v1094, %v1095
        %v1097 = vmin.f32 %v1046, %v1082
        %v1098 = vmin.f32 %v1047, %v1089
        %v1099 = vmin.f32 %v1048, %v1096
        %1100 = vrot.lane.b32.xlu0 %v204, 80
        %v1101 = vpop.permute.xlu0 %1100
        %1102 = vrot.lane.b32.xlu0 %v205, 80
        %v1103 = vpop.permute.xlu0 %1102
        %v1104 = vrot.slane %v1101, 4
        %v1105 = vrot.slane %v1103, 4
        %v1106 = vsel %vm221, %v1104, %v1105
        %vm1107 = vcmask 654336
        %v1108 = vsel %vm1107, %v1101, %v1106
        %v1109 = vsel %vm1107, %v1103, %v1105
        %v1112 = vsub.f32 %v202, %v1108
        %v1113 = vsub.f32 %v203, %v1109
        %v1114 = vand.u32 2147483647, %v1112
        %v1115 = vand.u32 2147483647, %v1113
        %1118 = vst [vmem:[#allocation1] ss:$2 sm:$0xff] %v1114
        %s1119 = scalar_lea.vmem [#allocation1], 16
        %1120 = vst [vmem:[%s1119] ss:$2 sm:$0xff] %v1115
        %v1121 = vld.sshfl [vmem:[#allocation1] sm:$0xff pattern:$0x75316420]
        %v1122 = vld.sshfl [vmem:[#allocation1 + $0x8] sm:$0xff pattern:$0x75316420]
        %v1123 = vld.sshfl [vmem:[#allocation1 + $0x10] sm:$0xff pattern:$0x75316420]
        %v1127 = vsel %vm221, %v1121, 0.0
        %v1128 = vrot.slane %v1127, 4
        %v1129 = vadd.f32 %v1127, %v1128
        %v1130 = vrot.slane %v1129, 2
        %v1131 = vadd.f32 %v1129, %v1130
        %v1132 = vrot.slane %v1131, 1
        %v1133 = vadd.f32 %v1131, %v1132
        %v1134 = vsel %vm221, %v1122, 0.0
        %v1135 = vrot.slane %v1134, 4
        %v1136 = vadd.f32 %v1134, %v1135
        %v1137 = vrot.slane %v1136, 2
        %v1138 = vadd.f32 %v1136, %v1137
        %v1139 = vrot.slane %v1138, 1
        %v1140 = vadd.f32 %v1138, %v1139
        %v1141 = vsel %vm236, %v1123, 0.0
        %v1142 = vrot.slane %v1141, 4
        %v1143 = vadd.f32 %v1141, %v1142
        %v1144 = vrot.slane %v1143, 2
        %v1145 = vadd.f32 %v1143, %v1144
        %v1146 = vrot.slane %v1145, 1
        %v1147 = vadd.f32 %v1145, %v1146
        %v1148 = vmin.f32 %v1097, %v1133
        %v1149 = vmin.f32 %v1098, %v1140
        %v1150 = vmin.f32 %v1099, %v1147
        %1151 = vrot.lane.b32.xlu0 %v204, 79
        %v1152 = vpop.permute.xlu0 %1151
        %1153 = vrot.lane.b32.xlu0 %v205, 79
        %v1154 = vpop.permute.xlu0 %1153
        %v1155 = vrot.slane %v1152, 4
        %v1156 = vrot.slane %v1154, 4
        %v1157 = vsel %vm221, %v1155, %v1156
        %vm1158 = vcmask 646144
        %v1159 = vsel %vm1158, %v1152, %v1157
        %v1160 = vsel %vm1158, %v1154, %v1156
        %v1163 = vsub.f32 %v202, %v1159
        %v1164 = vsub.f32 %v203, %v1160
        %v1165 = vand.u32 2147483647, %v1163
        %v1166 = vand.u32 2147483647, %v1164
        %1169 = vst [vmem:[#allocation1] ss:$2 sm:$0xff] %v1165
        %s1170 = scalar_lea.vmem [#allocation1], 16
        %1171 = vst [vmem:[%s1170] ss:$2 sm:$0xff] %v1166
        %v1172 = vld.sshfl [vmem:[#allocation1] sm:$0xff pattern:$0x75316420]
        %v1173 = vld.sshfl [vmem:[#allocation1 + $0x8] sm:$0xff pattern:$0x75316420]
        %v1174 = vld.sshfl [vmem:[#allocation1 + $0x10] sm:$0xff pattern:$0x75316420]
        %v1178 = vsel %vm221, %v1172, 0.0
        %v1179 = vrot.slane %v1178, 4
        %v1180 = vadd.f32 %v1178, %v1179
        %v1181 = vrot.slane %v1180, 2
        %v1182 = vadd.f32 %v1180, %v1181
        %v1183 = vrot.slane %v1182, 1
        %v1184 = vadd.f32 %v1182, %v1183
        %v1185 = vsel %vm221, %v1173, 0.0
        %v1186 = vrot.slane %v1185, 4
        %v1187 = vadd.f32 %v1185, %v1186
        %v1188 = vrot.slane %v1187, 2
        %v1189 = vadd.f32 %v1187, %v1188
        %v1190 = vrot.slane %v1189, 1
        %v1191 = vadd.f32 %v1189, %v1190
        %v1192 = vsel %vm236, %v1174, 0.0
        %v1193 = vrot.slane %v1192, 4
        %v1194 = vadd.f32 %v1192, %v1193
        %v1195 = vrot.slane %v1194, 2
        %v1196 = vadd.f32 %v1194, %v1195
        %v1197 = vrot.slane %v1196, 1
        %v1198 = vadd.f32 %v1196, %v1197
        %v1199 = vmin.f32 %v1148, %v1184
        %v1200 = vmin.f32 %v1149, %v1191
        %v1201 = vmin.f32 %v1150, %v1198
        %1202 = vrot.lane.b32.xlu0 %v204, 78
        %v1203 = vpop.permute.xlu0 %1202
        %1204 = vrot.lane.b32.xlu0 %v205, 78
        %v1205 = vpop.permute.xlu0 %1204
        %v1206 = vrot.slane %v1203, 4
        %v1207 = vrot.slane %v1205, 4
        %v1208 = vsel %vm221, %v1206, %v1207
        %vm1209 = vcmask 637952
        %v1210 = vsel %vm1209, %v1203, %v1208
        %v1211 = vsel %vm1209, %v1205, %v1207
        %v1214 = vsub.f32 %v202, %v1210
        %v1215 = vsub.f32 %v203, %v1211
        %v1216 = vand.u32 2147483647, %v1214
        %v1217 = vand.u32 2147483647, %v1215
        %1220 = vst [vmem:[#allocation1] ss:$2 sm:$0xff] %v1216
        %s1221 = scalar_lea.vmem [#allocation1], 16
        %1222 = vst [vmem:[%s1221] ss:$2 sm:$0xff] %v1217
        %v1223 = vld.sshfl [vmem:[#allocation1] sm:$0xff pattern:$0x75316420]
        %v1224 = vld.sshfl [vmem:[#allocation1 + $0x8] sm:$0xff pattern:$0x75316420]
        %v1225 = vld.sshfl [vmem:[#allocation1 + $0x10] sm:$0xff pattern:$0x75316420]
        %v1229 = vsel %vm221, %v1223, 0.0
        %v1230 = vrot.slane %v1229, 4
        %v1231 = vadd.f32 %v1229, %v1230
        %v1232 = vrot.slane %v1231, 2
        %v1233 = vadd.f32 %v1231, %v1232
        %v1234 = vrot.slane %v1233, 1
        %v1235 = vadd.f32 %v1233, %v1234
        %v1236 = vsel %vm221, %v1224, 0.0
        %v1237 = vrot.slane %v1236, 4
        %v1238 = vadd.f32 %v1236, %v1237
        %v1239 = vrot.slane %v1238, 2
        %v1240 = vadd.f32 %v1238, %v1239
        %v1241 = vrot.slane %v1240, 1
        %v1242 = vadd.f32 %v1240, %v1241
        %v1243 = vsel %vm236, %v1225, 0.0
        %v1244 = vrot.slane %v1243, 4
        %v1245 = vadd.f32 %v1243, %v1244
        %v1246 = vrot.slane %v1245, 2
        %v1247 = vadd.f32 %v1245, %v1246
        %v1248 = vrot.slane %v1247, 1
        %v1249 = vadd.f32 %v1247, %v1248
        %v1250 = vmin.f32 %v1199, %v1235
        %v1251 = vmin.f32 %v1200, %v1242
        %v1252 = vmin.f32 %v1201, %v1249
        %1253 = vrot.lane.b32.xlu0 %v204, 62
        %v1254 = vpop.permute.xlu0 %1253
        %1255 = vrot.lane.b32.xlu0 %v205, 62
        %v1256 = vpop.permute.xlu0 %1255
        %v1257 = vrot.slane %v1254, 4
        %v1258 = vrot.slane %v1256, 4
        %v1259 = vsel %vm221, %v1257, %v1258
        %vm1260 = vcmask 506880
        %v1261 = vsel %vm1260, %v1254, %v1259
        %v1262 = vsel %vm1260, %v1256, %v1258
        %v1265 = vsub.f32 %v202, %v1261
        %v1266 = vsub.f32 %v203, %v1262
        %v1267 = vand.u32 2147483647, %v1265
        %v1268 = vand.u32 2147483647, %v1266
        %1271 = vst [vmem:[#allocation1] ss:$2 sm:$0xff] %v1267
        %s1272 = scalar_lea.vmem [#allocation1], 16
        %1273 = vst [vmem:[%s1272] ss:$2 sm:$0xff] %v1268
        %v1274 = vld.sshfl [vmem:[#allocation1] sm:$0xff pattern:$0x75316420]
        %v1275 = vld.sshfl [vmem:[#allocation1 + $0x8] sm:$0xff pattern:$0x75316420]
        %v1276 = vld.sshfl [vmem:[#allocation1 + $0x10] sm:$0xff pattern:$0x75316420]
        %v1280 = vsel %vm221, %v1274, 0.0
        %v1281 = vrot.slane %v1280, 4
        %v1282 = vadd.f32 %v1280, %v1281
        %v1283 = vrot.slane %v1282, 2
        %v1284 = vadd.f32 %v1282, %v1283
        %v1285 = vrot.slane %v1284, 1
        %v1286 = vadd.f32 %v1284, %v1285
        %v1287 = vsel %vm221, %v1275, 0.0
        %v1288 = vrot.slane %v1287, 4
        %v1289 = vadd.f32 %v1287, %v1288
        %v1290 = vrot.slane %v1289, 2
        %v1291 = vadd.f32 %v1289, %v1290
        %v1292 = vrot.slane %v1291, 1
        %v1293 = vadd.f32 %v1291, %v1292
        %v1294 = vsel %vm236, %v1276, 0.0
        %v1295 = vrot.slane %v1294, 4
        %v1296 = vadd.f32 %v1294, %v1295
        %v1297 = vrot.slane %v1296, 2
        %v1298 = vadd.f32 %v1296, %v1297
        %v1299 = vrot.slane %v1298, 1
        %v1300 = vadd.f32 %v1298, %v1299
        %v1301 = vmin.f32 %v1250, %v1286
        %v1302 = vmin.f32 %v1251, %v1293
        %v1303 = vmin.f32 %v1252, %v1300
        %1304 = vrot.lane.b32.xlu0 %v204, 61
        %v1305 = vpop.permute.xlu0 %1304
        %1306 = vrot.lane.b32.xlu0 %v205, 61
        %v1307 = vpop.permute.xlu0 %1306
        %v1308 = vrot.slane %v1305, 4
        %v1309 = vrot.slane %v1307, 4
        %v1310 = vsel %vm221, %v1308, %v1309
        %vm1311 = vcmask 498688
        %v1312 = vsel %vm1311, %v1305, %v1310
        %v1313 = vsel %vm1311, %v1307, %v1309
        %v1316 = vsub.f32 %v202, %v1312
        %v1317 = vsub.f32 %v203, %v1313
        %v1318 = vand.u32 2147483647, %v1316
        %v1319 = vand.u32 2147483647, %v1317
        %1322 = vst [vmem:[#allocation1] ss:$2 sm:$0xff] %v1318
        %s1323 = scalar_lea.vmem [#allocation1], 16
        %1324 = vst [vmem:[%s1323] ss:$2 sm:$0xff] %v1319
        %v1325 = vld.sshfl [vmem:[#allocation1] sm:$0xff pattern:$0x75316420]
        %v1326 = vld.sshfl [vmem:[#allocation1 + $0x8] sm:$0xff pattern:$0x75316420]
        %v1327 = vld.sshfl [vmem:[#allocation1 + $0x10] sm:$0xff pattern:$0x75316420]
        %v1331 = vsel %vm221, %v1325, 0.0
        %v1332 = vrot.slane %v1331, 4
        %v1333 = vadd.f32 %v1331, %v1332
        %v1334 = vrot.slane %v1333, 2
        %v1335 = vadd.f32 %v1333, %v1334
        %v1336 = vrot.slane %v1335, 1
        %v1337 = vadd.f32 %v1335, %v1336
        %v1338 = vsel %vm221, %v1326, 0.0
        %v1339 = vrot.slane %v1338, 4
        %v1340 = vadd.f32 %v1338, %v1339
        %v1341 = vrot.slane %v1340, 2
        %v1342 = vadd.f32 %v1340, %v1341
        %v1343 = vrot.slane %v1342, 1
        %v1344 = vadd.f32 %v1342, %v1343
        %v1345 = vsel %vm236, %v1327, 0.0
        %v1346 = vrot.slane %v1345, 4
        %v1347 = vadd.f32 %v1345, %v1346
        %v1348 = vrot.slane %v1347, 2
        %v1349 = vadd.f32 %v1347, %v1348
        %v1350 = vrot.slane %v1349, 1
        %v1351 = vadd.f32 %v1349, %v1350
        %v1352 = vmin.f32 %v1301, %v1337
        %v1353 = vmin.f32 %v1302, %v1344
        %v1354 = vmin.f32 %v1303, %v1351
        %1355 = vrot.lane.b32.xlu0 %v204, 60
        %v1356 = vpop.permute.xlu0 %1355
        %1357 = vrot.lane.b32.xlu0 %v205, 60
        %v1358 = vpop.permute.xlu0 %1357
        %v1359 = vrot.slane %v1356, 4
        %v1360 = vrot.slane %v1358, 4
        %v1361 = vsel %vm221, %v1359, %v1360
        %vm1362 = vcmask 490496
        %v1363 = vsel %vm1362, %v1356, %v1361
        %v1364 = vsel %vm1362, %v1358, %v1360
        %v1367 = vsub.f32 %v202, %v1363
        %v1368 = vsub.f32 %v203, %v1364
        %v1369 = vand.u32 2147483647, %v1367
        %v1370 = vand.u32 2147483647, %v1368
        %1373 = vst [vmem:[#allocation1] ss:$2 sm:$0xff] %v1369
        %s1374 = scalar_lea.vmem [#allocation1], 16
        %1375 = vst [vmem:[%s1374] ss:$2 sm:$0xff] %v1370
        %v1376 = vld.sshfl [vmem:[#allocation1] sm:$0xff pattern:$0x75316420]
        %v1377 = vld.sshfl [vmem:[#allocation1 + $0x8] sm:$0xff pattern:$0x75316420]
        %v1378 = vld.sshfl [vmem:[#allocation1 + $0x10] sm:$0xff pattern:$0x75316420]
        %v1382 = vsel %vm221, %v1376, 0.0
        %v1383 = vrot.slane %v1382, 4
        %v1384 = vadd.f32 %v1382, %v1383
        %v1385 = vrot.slane %v1384, 2
        %v1386 = vadd.f32 %v1384, %v1385
        %v1387 = vrot.slane %v1386, 1
        %v1388 = vadd.f32 %v1386, %v1387
        %v1389 = vsel %vm221, %v1377, 0.0
        %v1390 = vrot.slane %v1389, 4
        %v1391 = vadd.f32 %v1389, %v1390
        %v1392 = vrot.slane %v1391, 2
        %v1393 = vadd.f32 %v1391, %v1392
        %v1394 = vrot.slane %v1393, 1
        %v1395 = vadd.f32 %v1393, %v1394
        %v1396 = vsel %vm236, %v1378, 0.0
        %v1397 = vrot.slane %v1396, 4
        %v1398 = vadd.f32 %v1396, %v1397
        %v1399 = vrot.slane %v1398, 2
        %v1400 = vadd.f32 %v1398, %v1399
        %v1401 = vrot.slane %v1400, 1
        %v1402 = vadd.f32 %v1400, %v1401
        %v1403 = vmin.f32 %v1352, %v1388
        %v1404 = vmin.f32 %v1353, %v1395
        %v1405 = vmin.f32 %v1354, %v1402
        %1406 = vrot.lane.b32.xlu0 %v204, 59
        %v1407 = vpop.permute.xlu0 %1406
        %1408 = vrot.lane.b32.xlu0 %v205, 59
        %v1409 = vpop.permute.xlu0 %1408
        %v1410 = vrot.slane %v1407, 4
        %v1411 = vrot.slane %v1409, 4
        %v1412 = vsel %vm221, %v1410, %v1411
        %vm1413 = vcmask 482304
        %v1414 = vsel %vm1413, %v1407, %v1412
        %v1415 = vsel %vm1413, %v1409, %v1411
        %v1418 = vsub.f32 %v202, %v1414
        %v1419 = vsub.f32 %v203, %v1415
        %v1420 = vand.u32 2147483647, %v1418
        %v1421 = vand.u32 2147483647, %v1419
        %1424 = vst [vmem:[#allocation1] ss:$2 sm:$0xff] %v1420
        %s1425 = scalar_lea.vmem [#allocation1], 16
        %1426 = vst [vmem:[%s1425] ss:$2 sm:$0xff] %v1421
        %v1427 = vld.sshfl [vmem:[#allocation1] sm:$0xff pattern:$0x75316420]
        %v1428 = vld.sshfl [vmem:[#allocation1 + $0x8] sm:$0xff pattern:$0x75316420]
        %v1429 = vld.sshfl [vmem:[#allocation1 + $0x10] sm:$0xff pattern:$0x75316420]
        %v1433 = vsel %vm221, %v1427, 0.0
        %v1434 = vrot.slane %v1433, 4
        %v1435 = vadd.f32 %v1433, %v1434
        %v1436 = vrot.slane %v1435, 2
        %v1437 = vadd.f32 %v1435, %v1436
        %v1438 = vrot.slane %v1437, 1
        %v1439 = vadd.f32 %v1437, %v1438
        %v1440 = vsel %vm221, %v1428, 0.0
        %v1441 = vrot.slane %v1440, 4
        %v1442 = vadd.f32 %v1440, %v1441
        %v1443 = vrot.slane %v1442, 2
        %v1444 = vadd.f32 %v1442, %v1443
        %v1445 = vrot.slane %v1444, 1
        %v1446 = vadd.f32 %v1444, %v1445
        %v1447 = vsel %vm236, %v1429, 0.0
        %v1448 = vrot.slane %v1447, 4
        %v1449 = vadd.f32 %v1447, %v1448
        %v1450 = vrot.slane %v1449, 2
        %v1451 = vadd.f32 %v1449, %v1450
        %v1452 = vrot.slane %v1451, 1
        %v1453 = vadd.f32 %v1451, %v1452
        %v1454 = vmin.f32 %v1403, %v1439
        %v1455 = vmin.f32 %v1404, %v1446
        %v1456 = vmin.f32 %v1405, %v1453
        %1457 = vrot.lane.b32.xlu0 %v204, 58
        %v1458 = vpop.permute.xlu0 %1457
        %1459 = vrot.lane.b32.xlu0 %v205, 58
        %v1460 = vpop.permute.xlu0 %1459
        %v1461 = vrot.slane %v1458, 4
        %v1462 = vrot.slane %v1460, 4
        %v1463 = vsel %vm221, %v1461, %v1462
        %vm1464 = vcmask 474112
        %v1465 = vsel %vm1464, %v1458, %v1463
        %v1466 = vsel %vm1464, %v1460, %v1462
        %v1469 = vsub.f32 %v202, %v1465
        %v1470 = vsub.f32 %v203, %v1466
        %v1471 = vand.u32 2147483647, %v1469
        %v1472 = vand.u32 2147483647, %v1470
        %1475 = vst [vmem:[#allocation1] ss:$2 sm:$0xff] %v1471
        %s1476 = scalar_lea.vmem [#allocation1], 16
        %1477 = vst [vmem:[%s1476] ss:$2 sm:$0xff] %v1472
        %v1478 = vld.sshfl [vmem:[#allocation1] sm:$0xff pattern:$0x75316420]
        %v1479 = vld.sshfl [vmem:[#allocation1 + $0x8] sm:$0xff pattern:$0x75316420]
        %v1480 = vld.sshfl [vmem:[#allocation1 + $0x10] sm:$0xff pattern:$0x75316420]
        %v1484 = vsel %vm221, %v1478, 0.0
        %v1485 = vrot.slane %v1484, 4
        %v1486 = vadd.f32 %v1484, %v1485
        %v1487 = vrot.slane %v1486, 2
        %v1488 = vadd.f32 %v1486, %v1487
        %v1489 = vrot.slane %v1488, 1
        %v1490 = vadd.f32 %v1488, %v1489
        %v1491 = vsel %vm221, %v1479, 0.0
        %v1492 = vrot.slane %v1491, 4
        %v1493 = vadd.f32 %v1491, %v1492
        %v1494 = vrot.slane %v1493, 2
        %v1495 = vadd.f32 %v1493, %v1494
        %v1496 = vrot.slane %v1495, 1
        %v1497 = vadd.f32 %v1495, %v1496
        %v1498 = vsel %vm236, %v1480, 0.0
        %v1499 = vrot.slane %v1498, 4
        %v1500 = vadd.f32 %v1498, %v1499
        %v1501 = vrot.slane %v1500, 2
        %v1502 = vadd.f32 %v1500, %v1501
        %v1503 = vrot.slane %v1502, 1
        %v1504 = vadd.f32 %v1502, %v1503
        %v1505 = vmin.f32 %v1454, %v1490
        %v1506 = vmin.f32 %v1455, %v1497
        %v1507 = vmin.f32 %v1456, %v1504
        %1508 = vrot.lane.b32.xlu0 %v204, 57
        %v1509 = vpop.permute.xlu0 %1508
        %1510 = vrot.lane.b32.xlu0 %v205, 57
        %v1511 = vpop.permute.xlu0 %1510
        %v1512 = vrot.slane %v1509, 4
        %v1513 = vrot.slane %v1511, 4
        %v1514 = vsel %vm221, %v1512, %v1513
        %vm1515 = vcmask 465920
        %v1516 = vsel %vm1515, %v1509, %v1514
        %v1517 = vsel %vm1515, %v1511, %v1513
        %v1520 = vsub.f32 %v202, %v1516
        %v1521 = vsub.f32 %v203, %v1517
        %v1522 = vand.u32 2147483647, %v1520
        %v1523 = vand.u32 2147483647, %v1521
        %1526 = vst [vmem:[#allocation1] ss:$2 sm:$0xff] %v1522
        %s1527 = scalar_lea.vmem [#allocation1], 16
        %1528 = vst [vmem:[%s1527] ss:$2 sm:$0xff] %v1523
        %v1529 = vld.sshfl [vmem:[#allocation1] sm:$0xff pattern:$0x75316420]
        %v1530 = vld.sshfl [vmem:[#allocation1 + $0x8] sm:$0xff pattern:$0x75316420]
        %v1531 = vld.sshfl [vmem:[#allocation1 + $0x10] sm:$0xff pattern:$0x75316420]
        %v1535 = vsel %vm221, %v1529, 0.0
        %v1536 = vrot.slane %v1535, 4
        %v1537 = vadd.f32 %v1535, %v1536
        %v1538 = vrot.slane %v1537, 2
        %v1539 = vadd.f32 %v1537, %v1538
        %v1540 = vrot.slane %v1539, 1
        %v1541 = vadd.f32 %v1539, %v1540
        %v1542 = vsel %vm221, %v1530, 0.0
        %v1543 = vrot.slane %v1542, 4
        %v1544 = vadd.f32 %v1542, %v1543
        %v1545 = vrot.slane %v1544, 2
        %v1546 = vadd.f32 %v1544, %v1545
        %v1547 = vrot.slane %v1546, 1
        %v1548 = vadd.f32 %v1546, %v1547
        %v1549 = vsel %vm236, %v1531, 0.0
        %v1550 = vrot.slane %v1549, 4
        %v1551 = vadd.f32 %v1549, %v1550
        %v1552 = vrot.slane %v1551, 2
        %v1553 = vadd.f32 %v1551, %v1552
        %v1554 = vrot.slane %v1553, 1
        %v1555 = vadd.f32 %v1553, %v1554
        %v1556 = vmin.f32 %v1505, %v1541
        %v1557 = vmin.f32 %v1506, %v1548
        %v1558 = vmin.f32 %v1507, %v1555
        %1559 = vrot.lane.b32.xlu0 %v204, 56
        %v1560 = vpop.permute.xlu0 %1559
        %1561 = vrot.lane.b32.xlu0 %v205, 56
        %v1562 = vpop.permute.xlu0 %1561
        %v1563 = vrot.slane %v1560, 4
        %v1564 = vrot.slane %v1562, 4
        %v1565 = vsel %vm221, %v1563, %v1564
        %vm1566 = vcmask 457728
        %v1567 = vsel %vm1566, %v1560, %v1565
        %v1568 = vsel %vm1566, %v1562, %v1564
        %v1571 = vsub.f32 %v202, %v1567
        %v1572 = vsub.f32 %v203, %v1568
        %v1573 = vand.u32 2147483647, %v1571
        %v1574 = vand.u32 2147483647, %v1572
        %1577 = vst [vmem:[#allocation1] ss:$2 sm:$0xff] %v1573
        %s1578 = scalar_lea.vmem [#allocation1], 16
        %1579 = vst [vmem:[%s1578] ss:$2 sm:$0xff] %v1574
        %v1580 = vld.sshfl [vmem:[#allocation1] sm:$0xff pattern:$0x75316420]
        %v1581 = vld.sshfl [vmem:[#allocation1 + $0x8] sm:$0xff pattern:$0x75316420]
        %v1582 = vld.sshfl [vmem:[#allocation1 + $0x10] sm:$0xff pattern:$0x75316420]
        %v1586 = vsel %vm221, %v1580, 0.0
        %v1587 = vrot.slane %v1586, 4
        %v1588 = vadd.f32 %v1586, %v1587
        %v1589 = vrot.slane %v1588, 2
        %v1590 = vadd.f32 %v1588, %v1589
        %v1591 = vrot.slane %v1590, 1
        %v1592 = vadd.f32 %v1590, %v1591
        %v1593 = vsel %vm221, %v1581, 0.0
        %v1594 = vrot.slane %v1593, 4
        %v1595 = vadd.f32 %v1593, %v1594
        %v1596 = vrot.slane %v1595, 2
        %v1597 = vadd.f32 %v1595, %v1596
        %v1598 = vrot.slane %v1597, 1
        %v1599 = vadd.f32 %v1597, %v1598
        %v1600 = vsel %vm236, %v1582, 0.0
        %v1601 = vrot.slane %v1600, 4
        %v1602 = vadd.f32 %v1600, %v1601
        %v1603 = vrot.slane %v1602, 2
        %v1604 = vadd.f32 %v1602, %v1603
        %v1605 = vrot.slane %v1604, 1
        %v1606 = vadd.f32 %v1604, %v1605
        %v1607 = vmin.f32 %v1556, %v1592
        %v1608 = vmin.f32 %v1557, %v1599
        %v1609 = vmin.f32 %v1558, %v1606
        %1610 = vrot.lane.b32.xlu0 %v204, 40
        %v1611 = vpop.permute.xlu0 %1610
        %1612 = vrot.lane.b32.xlu0 %v205, 40
        %v1613 = vpop.permute.xlu0 %1612
        %v1614 = vrot.slane %v1611, 4
        %v1615 = vrot.slane %v1613, 4
        %v1616 = vsel %vm221, %v1614, %v1615
        %vm1617 = vcmask 326656
        %v1618 = vsel %vm1617, %v1611, %v1616
        %v1619 = vsel %vm1617, %v1613, %v1615
        %v1622 = vsub.f32 %v202, %v1618
        %v1623 = vsub.f32 %v203, %v1619
        %v1624 = vand.u32 2147483647, %v1622
        %v1625 = vand.u32 2147483647, %v1623
        %1628 = vst [vmem:[#allocation1] ss:$2 sm:$0xff] %v1624
        %s1629 = scalar_lea.vmem [#allocation1], 16
        %1630 = vst [vmem:[%s1629] ss:$2 sm:$0xff] %v1625
        %v1631 = vld.sshfl [vmem:[#allocation1] sm:$0xff pattern:$0x75316420]
        %v1632 = vld.sshfl [vmem:[#allocation1 + $0x8] sm:$0xff pattern:$0x75316420]
        %v1633 = vld.sshfl [vmem:[#allocation1 + $0x10] sm:$0xff pattern:$0x75316420]
        %v1637 = vsel %vm221, %v1631, 0.0
        %v1638 = vrot.slane %v1637, 4
        %v1639 = vadd.f32 %v1637, %v1638
        %v1640 = vrot.slane %v1639, 2
        %v1641 = vadd.f32 %v1639, %v1640
        %v1642 = vrot.slane %v1641, 1
        %v1643 = vadd.f32 %v1641, %v1642
        %v1644 = vsel %vm221, %v1632, 0.0
        %v1645 = vrot.slane %v1644, 4
        %v1646 = vadd.f32 %v1644, %v1645
        %v1647 = vrot.slane %v1646, 2
        %v1648 = vadd.f32 %v1646, %v1647
        %v1649 = vrot.slane %v1648, 1
        %v1650 = vadd.f32 %v1648, %v1649
        %v1651 = vsel %vm236, %v1633, 0.0
        %v1652 = vrot.slane %v1651, 4
        %v1653 = vadd.f32 %v1651, %v1652
        %v1654 = vrot.slane %v1653, 2
        %v1655 = vadd.f32 %v1653, %v1654
        %v1656 = vrot.slane %v1655, 1
        %v1657 = vadd.f32 %v1655, %v1656
        %v1658 = vmin.f32 %v1607, %v1643
        %v1659 = vmin.f32 %v1608, %v1650
        %v1660 = vmin.f32 %v1609, %v1657
        %1661 = vrot.lane.b32.xlu0 %v204, 39
        %v1662 = vpop.permute.xlu0 %1661
        %1663 = vrot.lane.b32.xlu0 %v205, 39
        %v1664 = vpop.permute.xlu0 %1663
        %v1665 = vrot.slane %v1662, 4
        %v1666 = vrot.slane %v1664, 4
        %v1667 = vsel %vm221, %v1665, %v1666
        %vm1668 = vcmask 318464
        %v1669 = vsel %vm1668, %v1662, %v1667
        %v1670 = vsel %vm1668, %v1664, %v1666
        %v1673 = vsub.f32 %v202, %v1669
        %v1674 = vsub.f32 %v203, %v1670
        %v1675 = vand.u32 2147483647, %v1673
        %v1676 = vand.u32 2147483647, %v1674
        %1679 = vst [vmem:[#allocation1] ss:$2 sm:$0xff] %v1675
        %s1680 = scalar_lea.vmem [#allocation1], 16
        %1681 = vst [vmem:[%s1680] ss:$2 sm:$0xff] %v1676
        %v1682 = vld.sshfl [vmem:[#allocation1] sm:$0xff pattern:$0x75316420]
        %v1683 = vld.sshfl [vmem:[#allocation1 + $0x8] sm:$0xff pattern:$0x75316420]
        %v1684 = vld.sshfl [vmem:[#allocation1 + $0x10] sm:$0xff pattern:$0x75316420]
        %v1688 = vsel %vm221, %v1682, 0.0
        %v1689 = vrot.slane %v1688, 4
        %v1690 = vadd.f32 %v1688, %v1689
        %v1691 = vrot.slane %v1690, 2
        %v1692 = vadd.f32 %v1690, %v1691
        %v1693 = vrot.slane %v1692, 1
        %v1694 = vadd.f32 %v1692, %v1693
        %v1695 = vsel %vm221, %v1683, 0.0
        %v1696 = vrot.slane %v1695, 4
        %v1697 = vadd.f32 %v1695, %v1696
        %v1698 = vrot.slane %v1697, 2
        %v1699 = vadd.f32 %v1697, %v1698
        %v1700 = vrot.slane %v1699, 1
        %v1701 = vadd.f32 %v1699, %v1700
        %v1702 = vsel %vm236, %v1684, 0.0
        %v1703 = vrot.slane %v1702, 4
        %v1704 = vadd.f32 %v1702, %v1703
        %v1705 = vrot.slane %v1704, 2
        %v1706 = vadd.f32 %v1704, %v1705
        %v1707 = vrot.slane %v1706, 1
        %v1708 = vadd.f32 %v1706, %v1707
        %v1709 = vmin.f32 %v1658, %v1694
        %v1710 = vmin.f32 %v1659, %v1701
        %v1711 = vmin.f32 %v1660, %v1708
        %1712 = vrot.lane.b32.xlu0 %v204, 38
        %v1713 = vpop.permute.xlu0 %1712
        %1714 = vrot.lane.b32.xlu0 %v205, 38
        %v1715 = vpop.permute.xlu0 %1714
        %v1716 = vrot.slane %v1713, 4
        %v1717 = vrot.slane %v1715, 4
        %v1718 = vsel %vm221, %v1716, %v1717
        %vm1719 = vcmask 310272
        %v1720 = vsel %vm1719, %v1713, %v1718
        %v1721 = vsel %vm1719, %v1715, %v1717
        %v1724 = vsub.f32 %v202, %v1720
        %v1725 = vsub.f32 %v203, %v1721
        %v1726 = vand.u32 2147483647, %v1724
        %v1727 = vand.u32 2147483647, %v1725
        %1730 = vst [vmem:[#allocation1] ss:$2 sm:$0xff] %v1726
        %s1731 = scalar_lea.vmem [#allocation1], 16
        %1732 = vst [vmem:[%s1731] ss:$2 sm:$0xff] %v1727
        %v1733 = vld.sshfl [vmem:[#allocation1] sm:$0xff pattern:$0x75316420]
        %v1734 = vld.sshfl [vmem:[#allocation1 + $0x8] sm:$0xff pattern:$0x75316420]
        %v1735 = vld.sshfl [vmem:[#allocation1 + $0x10] sm:$0xff pattern:$0x75316420]
        %v1739 = vsel %vm221, %v1733, 0.0
        %v1740 = vrot.slane %v1739, 4
        %v1741 = vadd.f32 %v1739, %v1740
        %v1742 = vrot.slane %v1741, 2
        %v1743 = vadd.f32 %v1741, %v1742
        %v1744 = vrot.slane %v1743, 1
        %v1745 = vadd.f32 %v1743, %v1744
        %v1746 = vsel %vm221, %v1734, 0.0
        %v1747 = vrot.slane %v1746, 4
        %v1748 = vadd.f32 %v1746, %v1747
        %v1749 = vrot.slane %v1748, 2
        %v1750 = vadd.f32 %v1748, %v1749
        %v1751 = vrot.slane %v1750, 1
        %v1752 = vadd.f32 %v1750, %v1751
        %v1753 = vsel %vm236, %v1735, 0.0
        %v1754 = vrot.slane %v1753, 4
        %v1755 = vadd.f32 %v1753, %v1754
        %v1756 = vrot.slane %v1755, 2
        %v1757 = vadd.f32 %v1755, %v1756
        %v1758 = vrot.slane %v1757, 1
        %v1759 = vadd.f32 %v1757, %v1758
        %v1760 = vmin.f32 %v1709, %v1745
        %v1761 = vmin.f32 %v1710, %v1752
        %v1762 = vmin.f32 %v1711, %v1759
        %1763 = vrot.lane.b32.xlu0 %v204, 37
        %v1764 = vpop.permute.xlu0 %1763
        %1765 = vrot.lane.b32.xlu0 %v205, 37
        %v1766 = vpop.permute.xlu0 %1765
        %v1767 = vrot.slane %v1764, 4
        %v1768 = vrot.slane %v1766, 4
        %v1769 = vsel %vm221, %v1767, %v1768
        %vm1770 = vcmask 302080
        %v1771 = vsel %vm1770, %v1764, %v1769
        %v1772 = vsel %vm1770, %v1766, %v1768
        %v1775 = vsub.f32 %v202, %v1771
        %v1776 = vsub.f32 %v203, %v1772
        %v1777 = vand.u32 2147483647, %v1775
        %v1778 = vand.u32 2147483647, %v1776
        %1781 = vst [vmem:[#allocation1] ss:$2 sm:$0xff] %v1777
        %s1782 = scalar_lea.vmem [#allocation1], 16
        %1783 = vst [vmem:[%s1782] ss:$2 sm:$0xff] %v1778
        %v1784 = vld.sshfl [vmem:[#allocation1] sm:$0xff pattern:$0x75316420]
        %v1785 = vld.sshfl [vmem:[#allocation1 + $0x8] sm:$0xff pattern:$0x75316420]
        %v1786 = vld.sshfl [vmem:[#allocation1 + $0x10] sm:$0xff pattern:$0x75316420]
        %v1790 = vsel %vm221, %v1784, 0.0
        %v1791 = vrot.slane %v1790, 4
        %v1792 = vadd.f32 %v1790, %v1791
        %v1793 = vrot.slane %v1792, 2
        %v1794 = vadd.f32 %v1792, %v1793
        %v1795 = vrot.slane %v1794, 1
        %v1796 = vadd.f32 %v1794, %v1795
        %v1797 = vsel %vm221, %v1785, 0.0
        %v1798 = vrot.slane %v1797, 4
        %v1799 = vadd.f32 %v1797, %v1798
        %v1800 = vrot.slane %v1799, 2
        %v1801 = vadd.f32 %v1799, %v1800
        %v1802 = vrot.slane %v1801, 1
        %v1803 = vadd.f32 %v1801, %v1802
        %v1804 = vsel %vm236, %v1786, 0.0
        %v1805 = vrot.slane %v1804, 4
        %v1806 = vadd.f32 %v1804, %v1805
        %v1807 = vrot.slane %v1806, 2
        %v1808 = vadd.f32 %v1806, %v1807
        %v1809 = vrot.slane %v1808, 1
        %v1810 = vadd.f32 %v1808, %v1809
        %v1811 = vmin.f32 %v1760, %v1796
        %v1812 = vmin.f32 %v1761, %v1803
        %v1813 = vmin.f32 %v1762, %v1810
        %1814 = vrot.lane.b32.xlu0 %v204, 36
        %v1815 = vpop.permute.xlu0 %1814
        %1816 = vrot.lane.b32.xlu0 %v205, 36
        %v1817 = vpop.permute.xlu0 %1816
        %v1818 = vrot.slane %v1815, 4
        %v1819 = vrot.slane %v1817, 4
        %v1820 = vsel %vm221, %v1818, %v1819
        %vm1821 = vcmask 293888
        %v1822 = vsel %vm1821, %v1815, %v1820
        %v1823 = vsel %vm1821, %v1817, %v1819
        %v1826 = vsub.f32 %v202, %v1822
        %v1827 = vsub.f32 %v203, %v1823
        %v1828 = vand.u32 2147483647, %v1826
        %v1829 = vand.u32 2147483647, %v1827
        %1832 = vst [vmem:[#allocation1] ss:$2 sm:$0xff] %v1828
        %s1833 = scalar_lea.vmem [#allocation1], 16
        %1834 = vst [vmem:[%s1833] ss:$2 sm:$0xff] %v1829
        %v1835 = vld.sshfl [vmem:[#allocation1] sm:$0xff pattern:$0x75316420]
        %v1836 = vld.sshfl [vmem:[#allocation1 + $0x8] sm:$0xff pattern:$0x75316420]
        %v1837 = vld.sshfl [vmem:[#allocation1 + $0x10] sm:$0xff pattern:$0x75316420]
        %v1841 = vsel %vm221, %v1835, 0.0
        %v1842 = vrot.slane %v1841, 4
        %v1843 = vadd.f32 %v1841, %v1842
        %v1844 = vrot.slane %v1843, 2
        %v1845 = vadd.f32 %v1843, %v1844
        %v1846 = vrot.slane %v1845, 1
        %v1847 = vadd.f32 %v1845, %v1846
        %v1848 = vsel %vm221, %v1836, 0.0
        %v1849 = vrot.slane %v1848, 4
        %v1850 = vadd.f32 %v1848, %v1849
        %v1851 = vrot.slane %v1850, 2
        %v1852 = vadd.f32 %v1850, %v1851
        %v1853 = vrot.slane %v1852, 1
        %v1854 = vadd.f32 %v1852, %v1853
        %v1855 = vsel %vm236, %v1837, 0.0
        %v1856 = vrot.slane %v1855, 4
        %v1857 = vadd.f32 %v1855, %v1856
        %v1858 = vrot.slane %v1857, 2
        %v1859 = vadd.f32 %v1857, %v1858
        %v1860 = vrot.slane %v1859, 1
        %v1861 = vadd.f32 %v1859, %v1860
        %v1862 = vmin.f32 %v1811, %v1847
        %v1863 = vmin.f32 %v1812, %v1854
        %v1864 = vmin.f32 %v1813, %v1861
        %1865 = vrot.lane.b32.xlu0 %v204, 35
        %v1866 = vpop.permute.xlu0 %1865
        %1867 = vrot.lane.b32.xlu0 %v205, 35
        %v1868 = vpop.permute.xlu0 %1867
        %v1869 = vrot.slane %v1866, 4
        %v1870 = vrot.slane %v1868, 4
        %v1871 = vsel %vm221, %v1869, %v1870
        %vm1872 = vcmask 285696
        %v1873 = vsel %vm1872, %v1866, %v1871
        %v1874 = vsel %vm1872, %v1868, %v1870
        %v1877 = vsub.f32 %v202, %v1873
        %v1878 = vsub.f32 %v203, %v1874
        %v1879 = vand.u32 2147483647, %v1877
        %v1880 = vand.u32 2147483647, %v1878
        %1883 = vst [vmem:[#allocation1] ss:$2 sm:$0xff] %v1879
        %s1884 = scalar_lea.vmem [#allocation1], 16
        %1885 = vst [vmem:[%s1884] ss:$2 sm:$0xff] %v1880
        %v1886 = vld.sshfl [vmem:[#allocation1] sm:$0xff pattern:$0x75316420]
        %v1887 = vld.sshfl [vmem:[#allocation1 + $0x8] sm:$0xff pattern:$0x75316420]
        %v1888 = vld.sshfl [vmem:[#allocation1 + $0x10] sm:$0xff pattern:$0x75316420]
        %v1892 = vsel %vm221, %v1886, 0.0
        %v1893 = vrot.slane %v1892, 4
        %v1894 = vadd.f32 %v1892, %v1893
        %v1895 = vrot.slane %v1894, 2
        %v1896 = vadd.f32 %v1894, %v1895
        %v1897 = vrot.slane %v1896, 1
        %v1898 = vadd.f32 %v1896, %v1897
        %v1899 = vsel %vm221, %v1887, 0.0
        %v1900 = vrot.slane %v1899, 4
        %v1901 = vadd.f32 %v1899, %v1900
        %v1902 = vrot.slane %v1901, 2
        %v1903 = vadd.f32 %v1901, %v1902
        %v1904 = vrot.slane %v1903, 1
        %v1905 = vadd.f32 %v1903, %v1904
        %v1906 = vsel %vm236, %v1888, 0.0
        %v1907 = vrot.slane %v1906, 4
        %v1908 = vadd.f32 %v1906, %v1907
        %v1909 = vrot.slane %v1908, 2
        %v1910 = vadd.f32 %v1908, %v1909
        %v1911 = vrot.slane %v1910, 1
        %v1912 = vadd.f32 %v1910, %v1911
        %v1913 = vmin.f32 %v1862, %v1898
        %v1914 = vmin.f32 %v1863, %v1905
        %v1915 = vmin.f32 %v1864, %v1912
        %1916 = vrot.lane.b32.xlu0 %v204, 34
        %v1917 = vpop.permute.xlu0 %1916
        %1918 = vrot.lane.b32.xlu0 %v205, 34
        %v1919 = vpop.permute.xlu0 %1918
        %v1920 = vrot.slane %v1917, 4
        %v1921 = vrot.slane %v1919, 4
        %v1922 = vsel %vm221, %v1920, %v1921
        %vm1923 = vcmask 277504
        %v1924 = vsel %vm1923, %v1917, %v1922
        %v1925 = vsel %vm1923, %v1919, %v1921
        %v1928 = vsub.f32 %v202, %v1924
        %v1929 = vsub.f32 %v203, %v1925
        %v1930 = vand.u32 2147483647, %v1928
        %v1931 = vand.u32 2147483647, %v1929
        %1934 = vst [vmem:[#allocation1] ss:$2 sm:$0xff] %v1930
        %s1935 = scalar_lea.vmem [#allocation1], 16
        %1936 = vst [vmem:[%s1935] ss:$2 sm:$0xff] %v1931
        %v1937 = vld.sshfl [vmem:[#allocation1] sm:$0xff pattern:$0x75316420]
        %v1938 = vld.sshfl [vmem:[#allocation1 + $0x8] sm:$0xff pattern:$0x75316420]
        %v1939 = vld.sshfl [vmem:[#allocation1 + $0x10] sm:$0xff pattern:$0x75316420]
        %v1943 = vsel %vm221, %v1937, 0.0
        %v1944 = vrot.slane %v1943, 4
        %v1945 = vadd.f32 %v1943, %v1944
        %v1946 = vrot.slane %v1945, 2
        %v1947 = vadd.f32 %v1945, %v1946
        %v1948 = vrot.slane %v1947, 1
        %v1949 = vadd.f32 %v1947, %v1948
        %v1950 = vsel %vm221, %v1938, 0.0
        %v1951 = vrot.slane %v1950, 4
        %v1952 = vadd.f32 %v1950, %v1951
        %v1953 = vrot.slane %v1952, 2
        %v1954 = vadd.f32 %v1952, %v1953
        %v1955 = vrot.slane %v1954, 1
        %v1956 = vadd.f32 %v1954, %v1955
        %v1957 = vsel %vm236, %v1939, 0.0
        %v1958 = vrot.slane %v1957, 4
        %v1959 = vadd.f32 %v1957, %v1958
        %v1960 = vrot.slane %v1959, 2
        %v1961 = vadd.f32 %v1959, %v1960
        %v1962 = vrot.slane %v1961, 1
        %v1963 = vadd.f32 %v1961, %v1962
        %v1964 = vmin.f32 %v1913, %v1949
        %v1965 = vmin.f32 %v1914, %v1956
        %v1966 = vmin.f32 %v1915, %v1963
        %1967 = vrot.lane.b32.xlu0 %v204, 18
        %v1968 = vpop.permute.xlu0 %1967
        %1969 = vrot.lane.b32.xlu0 %v205, 18
        %v1970 = vpop.permute.xlu0 %1969
        %v1971 = vrot.slane %v1968, 4
        %v1972 = vrot.slane %v1970, 4
        %v1973 = vsel %vm221, %v1971, %v1972
        %vm1974 = vcmask 146432
        %v1975 = vsel %vm1974, %v1968, %v1973
        %v1976 = vsel %vm1974, %v1970, %v1972
        %v1979 = vsub.f32 %v202, %v1975
        %v1980 = vsub.f32 %v203, %v1976
        %v1981 = vand.u32 2147483647, %v1979
        %v1982 = vand.u32 2147483647, %v1980
        %1985 = vst [vmem:[#allocation1] ss:$2 sm:$0xff] %v1981
        %s1986 = scalar_lea.vmem [#allocation1], 16
        %1987 = vst [vmem:[%s1986] ss:$2 sm:$0xff] %v1982
        %v1988 = vld.sshfl [vmem:[#allocation1] sm:$0xff pattern:$0x75316420]
        %v1989 = vld.sshfl [vmem:[#allocation1 + $0x8] sm:$0xff pattern:$0x75316420]
        %v1990 = vld.sshfl [vmem:[#allocation1 + $0x10] sm:$0xff pattern:$0x75316420]
        %v1994 = vsel %vm221, %v1988, 0.0
        %v1995 = vrot.slane %v1994, 4
        %v1996 = vadd.f32 %v1994, %v1995
        %v1997 = vrot.slane %v1996, 2
        %v1998 = vadd.f32 %v1996, %v1997
        %v1999 = vrot.slane %v1998, 1
        %v2000 = vadd.f32 %v1998, %v1999
        %v2001 = vsel %vm221, %v1989, 0.0
        %v2002 = vrot.slane %v2001, 4
        %v2003 = vadd.f32 %v2001, %v2002
        %v2004 = vrot.slane %v2003, 2
        %v2005 = vadd.f32 %v2003, %v2004
        %v2006 = vrot.slane %v2005, 1
        %v2007 = vadd.f32 %v2005, %v2006
        %v2008 = vsel %vm236, %v1990, 0.0
        %v2009 = vrot.slane %v2008, 4
        %v2010 = vadd.f32 %v2008, %v2009
        %v2011 = vrot.slane %v2010, 2
        %v2012 = vadd.f32 %v2010, %v2011
        %v2013 = vrot.slane %v2012, 1
        %v2014 = vadd.f32 %v2012, %v2013
        %v2015 = vmin.f32 %v1964, %v2000
        %v2016 = vmin.f32 %v1965, %v2007
        %v2017 = vmin.f32 %v1966, %v2014
        %2018 = vrot.lane.b32.xlu0 %v204, 17
        %v2019 = vpop.permute.xlu0 %2018
        %2020 = vrot.lane.b32.xlu0 %v205, 17
        %v2021 = vpop.permute.xlu0 %2020
        %v2022 = vrot.slane %v2019, 4
        %v2023 = vrot.slane %v2021, 4
        %v2024 = vsel %vm221, %v2022, %v2023
        %vm2025 = vcmask 138240
        %v2026 = vsel %vm2025, %v2019, %v2024
        %v2027 = vsel %vm2025, %v2021, %v2023
        %v2030 = vsub.f32 %v202, %v2026
        %v2031 = vsub.f32 %v203, %v2027
        %v2032 = vand.u32 2147483647, %v2030
        %v2033 = vand.u32 2147483647, %v2031
        %2036 = vst [vmem:[#allocation1] ss:$2 sm:$0xff] %v2032
        %s2037 = scalar_lea.vmem [#allocation1], 16
        %2038 = vst [vmem:[%s2037] ss:$2 sm:$0xff] %v2033
        %v2039 = vld.sshfl [vmem:[#allocation1] sm:$0xff pattern:$0x75316420]
        %v2040 = vld.sshfl [vmem:[#allocation1 + $0x8] sm:$0xff pattern:$0x75316420]
        %v2041 = vld.sshfl [vmem:[#allocation1 + $0x10] sm:$0xff pattern:$0x75316420]
        %v2045 = vsel %vm221, %v2039, 0.0
        %v2046 = vrot.slane %v2045, 4
        %v2047 = vadd.f32 %v2045, %v2046
        %v2048 = vrot.slane %v2047, 2
        %v2049 = vadd.f32 %v2047, %v2048
        %v2050 = vrot.slane %v2049, 1
        %v2051 = vadd.f32 %v2049, %v2050
        %v2052 = vsel %vm221, %v2040, 0.0
        %v2053 = vrot.slane %v2052, 4
        %v2054 = vadd.f32 %v2052, %v2053
        %v2055 = vrot.slane %v2054, 2
        %v2056 = vadd.f32 %v2054, %v2055
        %v2057 = vrot.slane %v2056, 1
        %v2058 = vadd.f32 %v2056, %v2057
        %v2059 = vsel %vm236, %v2041, 0.0
        %v2060 = vrot.slane %v2059, 4
        %v2061 = vadd.f32 %v2059, %v2060
        %v2062 = vrot.slane %v2061, 2
        %v2063 = vadd.f32 %v2061, %v2062
        %v2064 = vrot.slane %v2063, 1
        %v2065 = vadd.f32 %v2063, %v2064
        %v2066 = vmin.f32 %v2015, %v2051
        %v2067 = vmin.f32 %v2016, %v2058
        %v2068 = vmin.f32 %v2017, %v2065
        %2069 = vrot.lane.b32.xlu0 %v204, 16
        %v2070 = vpop.permute.xlu0 %2069
        %2071 = vrot.lane.b32.xlu0 %v205, 16
        %v2072 = vpop.permute.xlu0 %2071
        %v2073 = vrot.slane %v2070, 4
        %v2074 = vrot.slane %v2072, 4
        %v2075 = vsel %vm221, %v2073, %v2074
        %vm2076 = vcmask 130048
        %v2077 = vsel %vm2076, %v2070, %v2075
        %v2078 = vsel %vm2076, %v2072, %v2074
        %v2081 = vsub.f32 %v202, %v2077
        %v2082 = vsub.f32 %v203, %v2078
        %v2083 = vand.u32 2147483647, %v2081
        %v2084 = vand.u32 2147483647, %v2082
        %2087 = vst [vmem:[#allocation1] ss:$2 sm:$0xff] %v2083
        %s2088 = scalar_lea.vmem [#allocation1], 16
        %2089 = vst [vmem:[%s2088] ss:$2 sm:$0xff] %v2084
        %v2090 = vld.sshfl [vmem:[#allocation1] sm:$0xff pattern:$0x75316420]
        %v2091 = vld.sshfl [vmem:[#allocation1 + $0x8] sm:$0xff pattern:$0x75316420]
        %v2092 = vld.sshfl [vmem:[#allocation1 + $0x10] sm:$0xff pattern:$0x75316420]
        %v2096 = vsel %vm221, %v2090, 0.0
        %v2097 = vrot.slane %v2096, 4
        %v2098 = vadd.f32 %v2096, %v2097
        %v2099 = vrot.slane %v2098, 2
        %v2100 = vadd.f32 %v2098, %v2099
        %v2101 = vrot.slane %v2100, 1
        %v2102 = vadd.f32 %v2100, %v2101
        %v2103 = vsel %vm221, %v2091, 0.0
        %v2104 = vrot.slane %v2103, 4
        %v2105 = vadd.f32 %v2103, %v2104
        %v2106 = vrot.slane %v2105, 2
        %v2107 = vadd.f32 %v2105, %v2106
        %v2108 = vrot.slane %v2107, 1
        %v2109 = vadd.f32 %v2107, %v2108
        %v2110 = vsel %vm236, %v2092, 0.0
        %v2111 = vrot.slane %v2110, 4
        %v2112 = vadd.f32 %v2110, %v2111
        %v2113 = vrot.slane %v2112, 2
        %v2114 = vadd.f32 %v2112, %v2113
        %v2115 = vrot.slane %v2114, 1
        %v2116 = vadd.f32 %v2114, %v2115
        %v2117 = vmin.f32 %v2066, %v2102
        %v2118 = vmin.f32 %v2067, %v2109
        %v2119 = vmin.f32 %v2068, %v2116
        %2120 = vrot.lane.b32.xlu0 %v204, 15
        %v2121 = vpop.permute.xlu0 %2120
        %2122 = vrot.lane.b32.xlu0 %v205, 15
        %v2123 = vpop.permute.xlu0 %2122
        %v2124 = vrot.slane %v2121, 4
        %v2125 = vrot.slane %v2123, 4
        %v2126 = vsel %vm221, %v2124, %v2125
        %vm2127 = vcmask 121856
        %v2128 = vsel %vm2127, %v2121, %v2126
        %v2129 = vsel %vm2127, %v2123, %v2125
        %v2132 = vsub.f32 %v202, %v2128
        %v2133 = vsub.f32 %v203, %v2129
        %v2134 = vand.u32 2147483647, %v2132
        %v2135 = vand.u32 2147483647, %v2133
        %2138 = vst [vmem:[#allocation1] ss:$2 sm:$0xff] %v2134
        %s2139 = scalar_lea.vmem [#allocation1], 16
        %2140 = vst [vmem:[%s2139] ss:$2 sm:$0xff] %v2135
        %v2141 = vld.sshfl [vmem:[#allocation1] sm:$0xff pattern:$0x75316420]
        %v2142 = vld.sshfl [vmem:[#allocation1 + $0x8] sm:$0xff pattern:$0x75316420]
        %v2143 = vld.sshfl [vmem:[#allocation1 + $0x10] sm:$0xff pattern:$0x75316420]
        %v2147 = vsel %vm221, %v2141, 0.0
        %v2148 = vrot.slane %v2147, 4
        %v2149 = vadd.f32 %v2147, %v2148
        %v2150 = vrot.slane %v2149, 2
        %v2151 = vadd.f32 %v2149, %v2150
        %v2152 = vrot.slane %v2151, 1
        %v2153 = vadd.f32 %v2151, %v2152
        %v2154 = vsel %vm221, %v2142, 0.0
        %v2155 = vrot.slane %v2154, 4
        %v2156 = vadd.f32 %v2154, %v2155
        %v2157 = vrot.slane %v2156, 2
        %v2158 = vadd.f32 %v2156, %v2157
        %v2159 = vrot.slane %v2158, 1
        %v2160 = vadd.f32 %v2158, %v2159
        %v2161 = vsel %vm236, %v2143, 0.0
        %v2162 = vrot.slane %v2161, 4
        %v2163 = vadd.f32 %v2161, %v2162
        %v2164 = vrot.slane %v2163, 2
        %v2165 = vadd.f32 %v2163, %v2164
        %v2166 = vrot.slane %v2165, 1
        %v2167 = vadd.f32 %v2165, %v2166
        %v2168 = vmin.f32 %v2117, %v2153
        %v2169 = vmin.f32 %v2118, %v2160
        %v2170 = vmin.f32 %v2119, %v2167
        %2171 = vrot.lane.b32.xlu0 %v204, 14
        %v2172 = vpop.permute.xlu0 %2171
        %2173 = vrot.lane.b32.xlu0 %v205, 14
        %v2174 = vpop.permute.xlu0 %2173
        %v2175 = vrot.slane %v2172, 4
        %v2176 = vrot.slane %v2174, 4
        %v2177 = vsel %vm221, %v2175, %v2176
        %vm2178 = vcmask 113664
        %v2179 = vsel %vm2178, %v2172, %v2177
        %v2180 = vsel %vm2178, %v2174, %v2176
        %v2183 = vsub.f32 %v202, %v2179
        %v2184 = vsub.f32 %v203, %v2180
        %v2185 = vand.u32 2147483647, %v2183
        %v2186 = vand.u32 2147483647, %v2184
        %2189 = vst [vmem:[#allocation1] ss:$2 sm:$0xff] %v2185
        %s2190 = scalar_lea.vmem [#allocation1], 16
        %2191 = vst [vmem:[%s2190] ss:$2 sm:$0xff] %v2186
        %v2192 = vld.sshfl [vmem:[#allocation1] sm:$0xff pattern:$0x75316420]
        %v2193 = vld.sshfl [vmem:[#allocation1 + $0x8] sm:$0xff pattern:$0x75316420]
        %v2194 = vld.sshfl [vmem:[#allocation1 + $0x10] sm:$0xff pattern:$0x75316420]
        %v2198 = vsel %vm221, %v2192, 0.0
        %v2199 = vrot.slane %v2198, 4
        %v2200 = vadd.f32 %v2198, %v2199
        %v2201 = vrot.slane %v2200, 2
        %v2202 = vadd.f32 %v2200, %v2201
        %v2203 = vrot.slane %v2202, 1
        %v2204 = vadd.f32 %v2202, %v2203
        %v2205 = vsel %vm221, %v2193, 0.0
        %v2206 = vrot.slane %v2205, 4
        %v2207 = vadd.f32 %v2205, %v2206
        %v2208 = vrot.slane %v2207, 2
        %v2209 = vadd.f32 %v2207, %v2208
        %v2210 = vrot.slane %v2209, 1
        %v2211 = vadd.f32 %v2209, %v2210
        %v2212 = vsel %vm236, %v2194, 0.0
        %v2213 = vrot.slane %v2212, 4
        %v2214 = vadd.f32 %v2212, %v2213
        %v2215 = vrot.slane %v2214, 2
        %v2216 = vadd.f32 %v2214, %v2215
        %v2217 = vrot.slane %v2216, 1
        %v2218 = vadd.f32 %v2216, %v2217
        %v2219 = vmin.f32 %v2168, %v2204
        %v2220 = vmin.f32 %v2169, %v2211
        %v2221 = vmin.f32 %v2170, %v2218
        %2222 = vrot.lane.b32.xlu0 %v204, 13
        %v2223 = vpop.permute.xlu0 %2222
        %2224 = vrot.lane.b32.xlu0 %v205, 13
        %v2225 = vpop.permute.xlu0 %2224
        %v2226 = vrot.slane %v2223, 4
        %v2227 = vrot.slane %v2225, 4
        %v2228 = vsel %vm221, %v2226, %v2227
        %vm2229 = vcmask 105472
        %v2230 = vsel %vm2229, %v2223, %v2228
        %v2231 = vsel %vm2229, %v2225, %v2227
        %v2234 = vsub.f32 %v202, %v2230
        %v2235 = vsub.f32 %v203, %v2231
        %v2236 = vand.u32 2147483647, %v2234
        %v2237 = vand.u32 2147483647, %v2235
        %2240 = vst [vmem:[#allocation1] ss:$2 sm:$0xff] %v2236
        %s2241 = scalar_lea.vmem [#allocation1], 16
        %2242 = vst [vmem:[%s2241] ss:$2 sm:$0xff] %v2237
        %v2243 = vld.sshfl [vmem:[#allocation1] sm:$0xff pattern:$0x75316420]
        %v2244 = vld.sshfl [vmem:[#allocation1 + $0x8] sm:$0xff pattern:$0x75316420]
        %v2245 = vld.sshfl [vmem:[#allocation1 + $0x10] sm:$0xff pattern:$0x75316420]
        %v2249 = vsel %vm221, %v2243, 0.0
        %v2250 = vrot.slane %v2249, 4
        %v2251 = vadd.f32 %v2249, %v2250
        %v2252 = vrot.slane %v2251, 2
        %v2253 = vadd.f32 %v2251, %v2252
        %v2254 = vrot.slane %v2253, 1
        %v2255 = vadd.f32 %v2253, %v2254
        %v2256 = vsel %vm221, %v2244, 0.0
        %v2257 = vrot.slane %v2256, 4
        %v2258 = vadd.f32 %v2256, %v2257
        %v2259 = vrot.slane %v2258, 2
        %v2260 = vadd.f32 %v2258, %v2259
        %v2261 = vrot.slane %v2260, 1
        %v2262 = vadd.f32 %v2260, %v2261
        %v2263 = vsel %vm236, %v2245, 0.0
        %v2264 = vrot.slane %v2263, 4
        %v2265 = vadd.f32 %v2263, %v2264
        %v2266 = vrot.slane %v2265, 2
        %v2267 = vadd.f32 %v2265, %v2266
        %v2268 = vrot.slane %v2267, 1
        %v2269 = vadd.f32 %v2267, %v2268
        %v2270 = vmin.f32 %v2219, %v2255
        %v2271 = vmin.f32 %v2220, %v2262
        %v2272 = vmin.f32 %v2221, %v2269
        %2273 = vrot.lane.b32.xlu0 %v204, 12
        %v2274 = vpop.permute.xlu0 %2273
        %2275 = vrot.lane.b32.xlu0 %v205, 12
        %v2276 = vpop.permute.xlu0 %2275
        %v2277 = vrot.slane %v2274, 4
        %v2278 = vrot.slane %v2276, 4
        %v2279 = vsel %vm221, %v2277, %v2278
        %vm2280 = vcmask 97280
        %v2281 = vsel %vm2280, %v2274, %v2279
        %v2282 = vsel %vm2280, %v2276, %v2278
        %v2285 = vsub.f32 %v202, %v2281
        %v2286 = vsub.f32 %v203, %v2282
        %v2287 = vand.u32 2147483647, %v2285
        %v2288 = vand.u32 2147483647, %v2286
        %2291 = vst [vmem:[#allocation1] ss:$2 sm:$0xff] %v2287
        %s2292 = scalar_lea.vmem [#allocation1], 16
        %2293 = vst [vmem:[%s2292] ss:$2 sm:$0xff] %v2288
        %v2294 = vld.sshfl [vmem:[#allocation1] sm:$0xff pattern:$0x75316420]
        %v2295 = vld.sshfl [vmem:[#allocation1 + $0x8] sm:$0xff pattern:$0x75316420]
        %v2296 = vld.sshfl [vmem:[#allocation1 + $0x10] sm:$0xff pattern:$0x75316420]
        %v2300 = vsel %vm221, %v2294, 0.0
        %v2301 = vrot.slane %v2300, 4
        %v2302 = vadd.f32 %v2300, %v2301
        %v2303 = vrot.slane %v2302, 2
        %v2304 = vadd.f32 %v2302, %v2303
        %v2305 = vrot.slane %v2304, 1
        %v2306 = vadd.f32 %v2304, %v2305
        %v2307 = vsel %vm221, %v2295, 0.0
        %v2308 = vrot.slane %v2307, 4
        %v2309 = vadd.f32 %v2307, %v2308
        %v2310 = vrot.slane %v2309, 2
        %v2311 = vadd.f32 %v2309, %v2310
        %v2312 = vrot.slane %v2311, 1
        %v2313 = vadd.f32 %v2311, %v2312
        %v2314 = vsel %vm236, %v2296, 0.0
        %v2315 = vrot.slane %v2314, 4
        %v2316 = vadd.f32 %v2314, %v2315
        %v2317 = vrot.slane %v2316, 2
        %v2318 = vadd.f32 %v2316, %v2317
        %v2319 = vrot.slane %v2318, 1
        %v2320 = vadd.f32 %v2318, %v2319
        %v2321 = vmin.f32 %v2270, %v2306
        %v2322 = vmin.f32 %v2271, %v2313
        %v2323 = vmin.f32 %v2272, %v2320
        %v2324 = vsel %vm403, %v402, %v399
        %v2327 = vsub.f32 %v202, %v2324
        %v2328 = vsub.f32 %v203, %v401
        %v2329 = vand.u32 2147483647, %v2327
        %v2330 = vand.u32 2147483647, %v2328
        %2333 = vst [vmem:[#allocation1] ss:$2 sm:$0xff] %v2329
        %s2334 = scalar_lea.vmem [#allocation1], 16
        %2335 = vst [vmem:[%s2334] ss:$2 sm:$0xff] %v2330
        %v2336 = vld.sshfl [vmem:[#allocation1] sm:$0xff pattern:$0x75316420]
        %v2337 = vld.sshfl [vmem:[#allocation1 + $0x8] sm:$0xff pattern:$0x75316420]
        %v2338 = vld.sshfl [vmem:[#allocation1 + $0x10] sm:$0xff pattern:$0x75316420]
        %v2342 = vsel %vm221, %v2336, 0.0
        %v2343 = vrot.slane %v2342, 4
        %v2344 = vadd.f32 %v2342, %v2343
        %v2345 = vrot.slane %v2344, 2
        %v2346 = vadd.f32 %v2344, %v2345
        %v2347 = vrot.slane %v2346, 1
        %v2348 = vadd.f32 %v2346, %v2347
        %v2349 = vsel %vm221, %v2337, 0.0
        %v2350 = vrot.slane %v2349, 4
        %v2351 = vadd.f32 %v2349, %v2350
        %v2352 = vrot.slane %v2351, 2
        %v2353 = vadd.f32 %v2351, %v2352
        %v2354 = vrot.slane %v2353, 1
        %v2355 = vadd.f32 %v2353, %v2354
        %v2356 = vsel %vm236, %v2338, 0.0
        %v2357 = vrot.slane %v2356, 4
        %v2358 = vadd.f32 %v2356, %v2357
        %v2359 = vrot.slane %v2358, 2
        %v2360 = vadd.f32 %v2358, %v2359
        %v2361 = vrot.slane %v2360, 1
        %v2362 = vadd.f32 %v2360, %v2361
        %v2363 = vmin.f32 %v2321, %v2348
        %v2364 = vmin.f32 %v2322, %v2355
        %v2365 = vmin.f32 %v2323, %v2362
        %v2366 = vsel %vm453, %v452, %v449
        %v2369 = vsub.f32 %v202, %v2366
        %v2370 = vsub.f32 %v203, %v451
        %v2371 = vand.u32 2147483647, %v2369
        %v2372 = vand.u32 2147483647, %v2370
        %2375 = vst [vmem:[#allocation1] ss:$2 sm:$0xff] %v2371
        %s2376 = scalar_lea.vmem [#allocation1], 16
        %2377 = vst [vmem:[%s2376] ss:$2 sm:$0xff] %v2372
        %v2378 = vld.sshfl [vmem:[#allocation1] sm:$0xff pattern:$0x75316420]
        %v2379 = vld.sshfl [vmem:[#allocation1 + $0x8] sm:$0xff pattern:$0x75316420]
        %v2380 = vld.sshfl [vmem:[#allocation1 + $0x10] sm:$0xff pattern:$0x75316420]
        %v2384 = vsel %vm221, %v2378, 0.0
        %v2385 = vrot.slane %v2384, 4
        %v2386 = vadd.f32 %v2384, %v2385
        %v2387 = vrot.slane %v2386, 2
        %v2388 = vadd.f32 %v2386, %v2387
        %v2389 = vrot.slane %v2388, 1
        %v2390 = vadd.f32 %v2388, %v2389
        %v2391 = vsel %vm221, %v2379, 0.0
        %v2392 = vrot.slane %v2391, 4
        %v2393 = vadd.f32 %v2391, %v2392
        %v2394 = vrot.slane %v2393, 2
        %v2395 = vadd.f32 %v2393, %v2394
        %v2396 = vrot.slane %v2395, 1
        %v2397 = vadd.f32 %v2395, %v2396
        %v2398 = vsel %vm236, %v2380, 0.0
        %v2399 = vrot.slane %v2398, 4
        %v2400 = vadd.f32 %v2398, %v2399
        %v2401 = vrot.slane %v2400, 2
        %v2402 = vadd.f32 %v2400, %v2401
        %v2403 = vrot.slane %v2402, 1
        %v2404 = vadd.f32 %v2402, %v2403
        %v2405 = vmin.f32 %v2363, %v2390
        %v2406 = vmin.f32 %v2364, %v2397
        %v2407 = vmin.f32 %v2365, %v2404
        %v2408 = vsel %vm503, %v502, %v499
        %v2411 = vsub.f32 %v202, %v2408
        %v2412 = vsub.f32 %v203, %v501
        %v2413 = vand.u32 2147483647, %v2411
        %v2414 = vand.u32 2147483647, %v2412
        %2417 = vst [vmem:[#allocation1] ss:$2 sm:$0xff] %v2413
        %s2418 = scalar_lea.vmem [#allocation1], 16
        %2419 = vst [vmem:[%s2418] ss:$2 sm:$0xff] %v2414
        %v2420 = vld.sshfl [vmem:[#allocation1] sm:$0xff pattern:$0x75316420]
        %v2421 = vld.sshfl [vmem:[#allocation1 + $0x8] sm:$0xff pattern:$0x75316420]
        %v2422 = vld.sshfl [vmem:[#allocation1 + $0x10] sm:$0xff pattern:$0x75316420]
        %v2426 = vsel %vm221, %v2420, 0.0
        %v2427 = vrot.slane %v2426, 4
        %v2428 = vadd.f32 %v2426, %v2427
        %v2429 = vrot.slane %v2428, 2
        %v2430 = vadd.f32 %v2428, %v2429
        %v2431 = vrot.slane %v2430, 1
        %v2432 = vadd.f32 %v2430, %v2431
        %v2433 = vsel %vm221, %v2421, 0.0
        %v2434 = vrot.slane %v2433, 4
        %v2435 = vadd.f32 %v2433, %v2434
        %v2436 = vrot.slane %v2435, 2
        %v2437 = vadd.f32 %v2435, %v2436
        %v2438 = vrot.slane %v2437, 1
        %v2439 = vadd.f32 %v2437, %v2438
        %v2440 = vsel %vm236, %v2422, 0.0
        %v2441 = vrot.slane %v2440, 4
        %v2442 = vadd.f32 %v2440, %v2441
        %v2443 = vrot.slane %v2442, 2
        %v2444 = vadd.f32 %v2442, %v2443
        %v2445 = vrot.slane %v2444, 1
        %v2446 = vadd.f32 %v2444, %v2445
        %v2447 = vmin.f32 %v2405, %v2432
        %v2448 = vmin.f32 %v2406, %v2439
        %v2449 = vmin.f32 %v2407, %v2446
        %2450 = vrot.lane.b32.xlu0 %v204, 121
        %v2451 = vpop.permute.xlu0 %2450
        %2452 = vrot.lane.b32.xlu0 %v205, 121
        %v2453 = vpop.permute.xlu0 %2452
        %v2454 = vrot.slane %v2451, 4
        %v2455 = vrot.slane %v2453, 4
        %v2456 = vsel %vm221, %v2454, %v2455
        %vm2457 = vcmask 990208
        %v2458 = vsel %vm2457, %v2456, %v2453
        %v2461 = vsub.f32 %v202, %v2458
        %v2462 = vsub.f32 %v203, %v2455
        %v2463 = vand.u32 2147483647, %v2461
        %v2464 = vand.u32 2147483647, %v2462
        %2467 = vst [vmem:[#allocation1] ss:$2 sm:$0xff] %v2463
        %s2468 = scalar_lea.vmem [#allocation1], 16
        %2469 = vst [vmem:[%s2468] ss:$2 sm:$0xff] %v2464
        %v2470 = vld.sshfl [vmem:[#allocation1] sm:$0xff pattern:$0x75316420]
        %v2471 = vld.sshfl [vmem:[#allocation1 + $0x8] sm:$0xff pattern:$0x75316420]
        %v2472 = vld.sshfl [vmem:[#allocation1 + $0x10] sm:$0xff pattern:$0x75316420]
        %v2476 = vsel %vm221, %v2470, 0.0
        %v2477 = vrot.slane %v2476, 4
        %v2478 = vadd.f32 %v2476, %v2477
        %v2479 = vrot.slane %v2478, 2
        %v2480 = vadd.f32 %v2478, %v2479
        %v2481 = vrot.slane %v2480, 1
        %v2482 = vadd.f32 %v2480, %v2481
        %v2483 = vsel %vm221, %v2471, 0.0
        %v2484 = vrot.slane %v2483, 4
        %v2485 = vadd.f32 %v2483, %v2484
        %v2486 = vrot.slane %v2485, 2
        %v2487 = vadd.f32 %v2485, %v2486
        %v2488 = vrot.slane %v2487, 1
        %v2489 = vadd.f32 %v2487, %v2488
        %v2490 = vsel %vm236, %v2472, 0.0
        %v2491 = vrot.slane %v2490, 4
        %v2492 = vadd.f32 %v2490, %v2491
        %v2493 = vrot.slane %v2492, 2
        %v2494 = vadd.f32 %v2492, %v2493
        %v2495 = vrot.slane %v2494, 1
        %v2496 = vadd.f32 %v2494, %v2495
        %v2497 = vmin.f32 %v2447, %v2482
        %v2498 = vmin.f32 %v2448, %v2489
        %v2499 = vmin.f32 %v2449, %v2496
        %2500 = vrot.lane.b32.xlu0 %v204, 120
        %v2501 = vpop.permute.xlu0 %2500
        %2502 = vrot.lane.b32.xlu0 %v205, 120
        %v2503 = vpop.permute.xlu0 %2502
        %v2504 = vrot.slane %v2501, 4
        %v2505 = vrot.slane %v2503, 4
        %v2506 = vsel %vm221, %v2504, %v2505
        %vm2507 = vcmask 982016
        %v2508 = vsel %vm2507, %v2506, %v2503
        %v2511 = vsub.f32 %v202, %v2508
        %v2512 = vsub.f32 %v203, %v2505
        %v2513 = vand.u32 2147483647, %v2511
        %v2514 = vand.u32 2147483647, %v2512
        %2517 = vst [vmem:[#allocation1] ss:$2 sm:$0xff] %v2513
        %s2518 = scalar_lea.vmem [#allocation1], 16
        %2519 = vst [vmem:[%s2518] ss:$2 sm:$0xff] %v2514
        %v2520 = vld.sshfl [vmem:[#allocation1] sm:$0xff pattern:$0x75316420]
        %v2521 = vld.sshfl [vmem:[#allocation1 + $0x8] sm:$0xff pattern:$0x75316420]
        %v2522 = vld.sshfl [vmem:[#allocation1 + $0x10] sm:$0xff pattern:$0x75316420]
        %v2526 = vsel %vm221, %v2520, 0.0
        %v2527 = vrot.slane %v2526, 4
        %v2528 = vadd.f32 %v2526, %v2527
        %v2529 = vrot.slane %v2528, 2
        %v2530 = vadd.f32 %v2528, %v2529
        %v2531 = vrot.slane %v2530, 1
        %v2532 = vadd.f32 %v2530, %v2531
        %v2533 = vsel %vm221, %v2521, 0.0
        %v2534 = vrot.slane %v2533, 4
        %v2535 = vadd.f32 %v2533, %v2534
        %v2536 = vrot.slane %v2535, 2
        %v2537 = vadd.f32 %v2535, %v2536
        %v2538 = vrot.slane %v2537, 1
        %v2539 = vadd.f32 %v2537, %v2538
        %v2540 = vsel %vm236, %v2522, 0.0
        %v2541 = vrot.slane %v2540, 4
        %v2542 = vadd.f32 %v2540, %v2541
        %v2543 = vrot.slane %v2542, 2
        %v2544 = vadd.f32 %v2542, %v2543
        %v2545 = vrot.slane %v2544, 1
        %v2546 = vadd.f32 %v2544, %v2545
        %v2547 = vmin.f32 %v2497, %v2532
        %v2548 = vmin.f32 %v2498, %v2539
        %v2549 = vmin.f32 %v2499, %v2546
        %2550 = vrot.lane.b32.xlu0 %v204, 119
        %v2551 = vpop.permute.xlu0 %2550
        %2552 = vrot.lane.b32.xlu0 %v205, 119
        %v2553 = vpop.permute.xlu0 %2552
        %v2554 = vrot.slane %v2551, 4
        %v2555 = vrot.slane %v2553, 4
        %v2556 = vsel %vm221, %v2554, %v2555
        %vm2557 = vcmask 973824
        %v2558 = vsel %vm2557, %v2556, %v2553
        %v2561 = vsub.f32 %v202, %v2558
        %v2562 = vsub.f32 %v203, %v2555
        %v2563 = vand.u32 2147483647, %v2561
        %v2564 = vand.u32 2147483647, %v2562
        %2567 = vst [vmem:[#allocation1] ss:$2 sm:$0xff] %v2563
        %s2568 = scalar_lea.vmem [#allocation1], 16
        %2569 = vst [vmem:[%s2568] ss:$2 sm:$0xff] %v2564
        %v2570 = vld.sshfl [vmem:[#allocation1] sm:$0xff pattern:$0x75316420]
        %v2571 = vld.sshfl [vmem:[#allocation1 + $0x8] sm:$0xff pattern:$0x75316420]
        %v2572 = vld.sshfl [vmem:[#allocation1 + $0x10] sm:$0xff pattern:$0x75316420]
        %v2576 = vsel %vm221, %v2570, 0.0
        %v2577 = vrot.slane %v2576, 4
        %v2578 = vadd.f32 %v2576, %v2577
        %v2579 = vrot.slane %v2578, 2
        %v2580 = vadd.f32 %v2578, %v2579
        %v2581 = vrot.slane %v2580, 1
        %v2582 = vadd.f32 %v2580, %v2581
        %v2583 = vsel %vm221, %v2571, 0.0
        %v2584 = vrot.slane %v2583, 4
        %v2585 = vadd.f32 %v2583, %v2584
        %v2586 = vrot.slane %v2585, 2
        %v2587 = vadd.f32 %v2585, %v2586
        %v2588 = vrot.slane %v2587, 1
        %v2589 = vadd.f32 %v2587, %v2588
        %v2590 = vsel %vm236, %v2572, 0.0
        %v2591 = vrot.slane %v2590, 4
        %v2592 = vadd.f32 %v2590, %v2591
        %v2593 = vrot.slane %v2592, 2
        %v2594 = vadd.f32 %v2592, %v2593
        %v2595 = vrot.slane %v2594, 1
        %v2596 = vadd.f32 %v2594, %v2595
        %v2597 = vmin.f32 %v2547, %v2582
        %v2598 = vmin.f32 %v2548, %v2589
        %v2599 = vmin.f32 %v2549, %v2596
        %2600 = vrot.lane.b32.xlu0 %v204, 118
        %v2601 = vpop.permute.xlu0 %2600
        %2602 = vrot.lane.b32.xlu0 %v205, 118
        %v2603 = vpop.permute.xlu0 %2602
        %v2604 = vrot.slane %v2601, 4
        %v2605 = vrot.slane %v2603, 4
        %v2606 = vsel %vm221, %v2604, %v2605
        %vm2607 = vcmask 965632
        %v2608 = vsel %vm2607, %v2606, %v2603
        %v2611 = vsub.f32 %v202, %v2608
        %v2612 = vsub.f32 %v203, %v2605
        %v2613 = vand.u32 2147483647, %v2611
        %v2614 = vand.u32 2147483647, %v2612
        %2617 = vst [vmem:[#allocation1] ss:$2 sm:$0xff] %v2613
        %s2618 = scalar_lea.vmem [#allocation1], 16
        %2619 = vst [vmem:[%s2618] ss:$2 sm:$0xff] %v2614
        %v2620 = vld.sshfl [vmem:[#allocation1] sm:$0xff pattern:$0x75316420]
        %v2621 = vld.sshfl [vmem:[#allocation1 + $0x8] sm:$0xff pattern:$0x75316420]
        %v2622 = vld.sshfl [vmem:[#allocation1 + $0x10] sm:$0xff pattern:$0x75316420]
        %v2626 = vsel %vm221, %v2620, 0.0
        %v2627 = vrot.slane %v2626, 4
        %v2628 = vadd.f32 %v2626, %v2627
        %v2629 = vrot.slane %v2628, 2
        %v2630 = vadd.f32 %v2628, %v2629
        %v2631 = vrot.slane %v2630, 1
        %v2632 = vadd.f32 %v2630, %v2631
        %v2633 = vsel %vm221, %v2621, 0.0
        %v2634 = vrot.slane %v2633, 4
        %v2635 = vadd.f32 %v2633, %v2634
        %v2636 = vrot.slane %v2635, 2
        %v2637 = vadd.f32 %v2635, %v2636
        %v2638 = vrot.slane %v2637, 1
        %v2639 = vadd.f32 %v2637, %v2638
        %v2640 = vsel %vm236, %v2622, 0.0
        %v2641 = vrot.slane %v2640, 4
        %v2642 = vadd.f32 %v2640, %v2641
        %v2643 = vrot.slane %v2642, 2
        %v2644 = vadd.f32 %v2642, %v2643
        %v2645 = vrot.slane %v2644, 1
        %v2646 = vadd.f32 %v2644, %v2645
        %v2647 = vmin.f32 %v2597, %v2632
        %v2648 = vmin.f32 %v2598, %v2639
        %v2649 = vmin.f32 %v2599, %v2646
        %v2650 = vmul.f32 %v2647, 0.25
        %v2651 = vmul.f32 %v2648, 0.25
        %v2652 = vmul.f32 %v2649, 0.25
        %v2656 = vrot.slane %v2651, 7
        %v2657 = vrot.slane %v2652, 6
        %vm2658 = vcmask 1040384
        %v2659 = vsel %vm2658, %v2650, %v2656
        %vm2660 = vcmask 1041408
        %v2661 = vsel %vm2660, %v2659, %v2657
        %v2663 = vlaneseq
        %vm2664 = vcmp.ge.s32.totalorder %v2663, 0
        %vm2665 = vcmp.lt.s32.totalorder %v2663, 352
        %vm2666 = vmand %vm2664, %vm2665
        %2667 = vst.msk [vmem:[%s201] sm:$0x7] %vm2666, %v2661
        %s2668 = sand.u32 %s82, 1
        %s2669 = scalar_lea.sflag [#allocation4], %s2668
        %s2670 = sand.u32 %s82, 1
        %s2671 = smul.addr %s2670, 3
        %s2672 = scalar_lea.vmem [#allocation7], %s2671
        // Predicated region
        $region37: #{tpu_custom_call.1} parent=27 // pred_check
          %p2673 = pneg %p92
        $region38: #{tpu_custom_call.1} parent=27 // pred_check_branch
          %2675 = sbr.rel (%p2673) target = $region40
        $region39: #{tpu_custom_call.1} parent=27 // pred_region
          %2677 = vsyncadd %s2669, 0
          %s2678 = smul.addr %s22, 3
          %s2679 = scalar_lea.hbm %s2, %s2678
          %s2681 = sshll.u32 %s2672, 4
          %s2682 = int_to_ptr.vmem [resolvable:$true] %s2681
          %s2683 = sshll.u32 %s2679, 4
          %s2684 = int_to_ptr.hbm [resolvable:$true] %s2683
          %2686 = dma.vmem_to_hbm [thread:$0]  %s2682, 48, %s2684, %s2669
        $region40: #{tpu_custom_call.1} parent=27 // pred_fallthru
          _
      $region28: #{tpu_custom_call.1} parent=5 // pred_fallthru
        _
      %p2687 = scmp.le.s32.totalorder 2, %s17
      // Predicated region
      $region41: #{tpu_custom_call.1} parent=5 // pred_check
        %p2688 = pneg %p2687
      $region42: #{tpu_custom_call.1} parent=5 // pred_check_branch
        %2690 = sbr.rel (%p2688) target = $region44
      $region43: #{tpu_custom_call.1} parent=5 // pred_region
        %s2691 = ssub.s32 %s17, 2
        // Predicated region
        $region45: #{tpu_custom_call.1} parent=43 // pred_check
          %p2692 = pneg %p98
        $region46: #{tpu_custom_call.1} parent=43 // pred_check_branch
          %2694 = sbr.rel (%p2692) target = $region48
        $region47: #{tpu_custom_call.1} parent=43 // pred_region
          %s2695 = sand.u32 %s83, 1
          %s2696 = scalar_lea.sflag [#allocation4], %s2695
          %s2697 = sand.u32 %s83, 1
          %s2698 = smul.addr %s2697, 3
          %s2699 = scalar_lea.vmem [#allocation7], %s2698
          %2701 = dma.done %s2696, 48
        $region48: #{tpu_custom_call.1} parent=43 // pred_fallthru
          _
      $region44: #{tpu_custom_call.1} parent=5 // pred_fallthru
        _
    $region6: #{tpu_custom_call.1} parent=1 // loop_footer
      %s21 = sadd.s32 1, %s17
    $region7: #{tpu_custom_call.1} parent=1 // loop_footer_branch
      %16 = sbr.rel target = $region3
    $region8: #{tpu_custom_call.1} parent=1 // loop_exit
      _
    %2702 = vsyncpa [#allocation3], 1
    %s2703 = scalar_lea.sflag [#allocation3], 1
    %2704 = vsyncpa %s2703, 1
    %2705 = vsyncpa [#allocation6], 1
    %s2706 = scalar_lea.sflag [#allocation6], 1
    %2707 = vsyncpa %s2706, 1
    %2708 = vsyncpa [#allocation4], 1
    %s2709 = scalar_lea.sflag [#allocation4], 1
    %2710 = vsyncpa %s2709, 1

</llo_original>
